<compile_context>
chip_gen: v6e
topology: v6e:2x2x1
jax: 0.10.0
libtpu: 0.0.40
codegen_flags: <defaults>
</compile_context>

<pallas_src>
import math
from functools import partial

import jax
import jax.numpy as jnp
from jax import lax
from jax.experimental import pallas as pl
from jax.experimental.pallas import tpu as pltpu

# ---------------- small, (8,128)-aligned synthetic configuration ------------
DIM = 128           # "dim" (original use implies 128: total_output is (100, 256))
UNITS = 128         # reservoir_units (scaled down from 1000, kept 128-aligned)
SEQ = 8             # sequence length per stream
BATCH = 16          # batch (original hard-codes 100; generalised, 8-aligned)
BATCH_BLOCK = 8     # batch tile -> parallel grid axis (v7x: shards across TCs)
MLP_DIM = 128       # FeedForward hidden dim
DEPTH = 2
LEAKY = 1.0         # static python float by contract (trace-time branch)
INPUT_SCALING = 1.0
SPECTRAL_RADIUS = 0.9
CYCLE_WEIGHT = 0.05
JUMP_WEIGHT = 0.5
JUMP_SIZE = 7       # scaled down from 137 for UNITS=128
CONNECTION_WEIGHT = 0.08
LN_EPS = 1e-5       # torch.nn.LayerNorm default


# ---------------- fused per-depth-layer Pallas kernel ------------------------
def _fused_layer_kernel(x_ref,
                        w_in_ref, w_hat_ref, w_out_ref, b_out_ref,
                        ln_g_ref, ln_b_ref, w1_ref, b1_ref, w2_ref, b2_ref,
                        total_ref, *, leaky, inv_depth):
    """One depth layer for one batch tile.

    x_ref:     (T, Bb, 2D)  bf16  time-major, [x1 | x2] concatenated on lanes
    w_in_ref:  (1, 2D, 2U)  bf16  blockdiag(w_in1,  w_in2)
    w_hat_ref: (1, 2U, 2U)  bf16  blockdiag(w_hat1, w_hat2)
    w_out_ref: (1, 2U, 2D)  bf16  blockdiag(w_out1, w_out2)
    b_out_ref: (1, 1, 2D)   f32   [b_out1 | b_out2]
    ln_*/w1/b1/w2/b2:             PreNorm + FeedForward params (w1/w2 bf16)
    total_ref: (Bb, 2D)     f32   accumulator, resident across the depth axis
    """
    d = pl.program_id(1)
    T, Bb, D2 = x_ref.shape

    # hoisted input projection: one (T*Bb, 2D) x (2D, 2U) bf16 matmul, f32 acc
    x = x_ref[...].reshape(T * Bb, D2)
    pre = jnp.dot(x, w_in_ref[0], preferred_element_type=jnp.float32)  # (T*Bb, 2U)
    w_hat = w_hat_ref[0]

    # Recurrence, fully unrolled (T static & small).  Both streams live in one
    # 2U-wide state with a block-diagonal recurrent matrix: each serial step is
    # a single 256-wide MXU matmul (fills the v6e/v7x 256x256 MXU exactly).
    # `leaky` must be a static python float (trace-time simplification).
    if leaky == 1.0:
        h = jnp.tanh(pre[0:Bb, :])
    else:
        h = leaky * jnp.tanh(pre[0:Bb, :])
    for t in range(1, T):
        pre_t = pre[t * Bb:(t + 1) * Bb, :]        # contiguous (Bb, 2U) slab
        a = jnp.tanh(pre_t + jnp.dot(h.astype(w_hat.dtype), w_hat,
                                     preferred_element_type=jnp.float32))
        if leaky == 1.0:
            h = a
        else:
            h = (1.0 - leaky) * h + leaky * a

    # readout straight into the concatenated (Bb, 2D) slab (lane-dense store)
    w_out = w_out_ref[0]
    z = (jnp.dot(h.astype(w_out.dtype), w_out,
                 preferred_element_type=jnp.float32) + b_out_ref[0])

    # Residual(PreNorm(FeedForward)); LN / GELU in f32 (v5e has no bf16 VPU/EUP)
    mu = jnp.mean(z, axis=-1, keepdims=True)
    var = jnp.mean(jnp.square(z - mu), axis=-1, keepdims=True)
    zn = (z - mu) * lax.rsqrt(var + LN_EPS)
    zn = zn * ln_g_ref[0] + ln_b_ref[0]
    w1 = w1_ref[0]
    hmid = jnp.dot(zn.astype(w1.dtype), w1,
                   preferred_element_type=jnp.float32) + b1_ref[0]
    # tanh-approx GELU: tanh uses the (otherwise idle) EUP slot instead of the
    # multi-op erf VPU polynomial.
    c = math.sqrt(2.0 / math.pi)
    hmid = 0.5 * hmid * (1.0 + jnp.tanh(c * (hmid + 0.044715 * hmid * hmid * hmid)))
    w2 = w2_ref[0]
    y = jnp.dot(hmid.astype(w2.dtype), w2,
                preferred_element_type=jnp.float32) + b2_ref[0]
    out = y + z

    # depth accumulation in VMEM (output block resident across the depth axis)
    @pl.when(d == 0)
    def _():
        total_ref[...] = jnp.zeros_like(total_ref)

    total_ref[...] += out

    @pl.when(d == pl.num_programs(1) - 1)
    def _():
        total_ref[...] = total_ref[...] * inv_depth


# ---------------- wrapper: one pallas_call for the whole forward -------------
_W_ORDER = ("w_in", "w_hat", "w_out", "b_out",
            "ln_g", "ln_b", "w1", "b1", "w2", "b2")
_W_MATMUL = ("w_in", "w_hat", "w_out", "w1", "w2")   # cast to bf16 (MXU operands)


def reservoir_forward(params, x1, x2, leaky=LEAKY, batch_block=BATCH_BLOCK):
    """x1, x2: (B, T, D) -> (B, 2*D), matching Reservoir.forward."""
    B, T, D = x1.shape
    assert x2.shape == (B, T, D)
    depth = int(params["w_hat"].shape[0])
    d2 = 2 * D
    tb = min(batch_block, B)
    assert B % tb == 0, "batch must be divisible by the batch block"

    # Wrapper-side layout plumbing (one-time XLA ops, outside the kernel):
    #  * concat the two streams on lanes       -> (B, T, 2D)
    #  * time-major so pre[t] is a contiguous slab in-kernel -> (T, B, 2D)
    #  * bf16 operands for full MXU rate; accumulation stays f32 in-kernel
    x_cat = jnp.concatenate([x1, x2], axis=-1).astype(jnp.bfloat16)
    x_cat = jnp.transpose(x_cat, (1, 0, 2))

    weights = []
    for name in _W_ORDER:
        w = params[name]
        w = w.astype(jnp.bfloat16 if name in _W_MATMUL else jnp.float32)
        weights.append(w)

    def w_spec(arr):                       # depth-sliced weight block
        nrest = arr.ndim - 1
        return pl.BlockSpec((1,) + arr.shape[1:],
                            lambda b, d, _n=nrest: (d,) + (0,) * _n)

    in_specs = ([pl.BlockSpec((T, tb, d2), lambda b, d: (0, b, 0))]
                + [w_spec(w) for w in weights])

    return pl.pallas_call(
        partial(_fused_layer_kernel, leaky=float(leaky), inv_depth=1.0 / depth),
        grid=(B // tb, depth),             # (parallel batch tiles, depth reduction)
        in_specs=in_specs,
        out_specs=pl.BlockSpec((tb, d2), lambda b, d: (b, 0)),
        out_shape=jax.ShapeDtypeStruct((B, d2), jnp.float32),
        compiler_params=pltpu.CompilerParams(
            dimension_semantics=("parallel", "arbitrary"),
            vmem_limit_bytes=32 * 1024 * 1024),
    )(x_cat, *weights)


# ---------------- deterministic parameter construction -----------------------
def _spectral_norm_estimate(w, iters=30):
    # TODO(synk): exact spectral-radius normalisation of the original
    # ReservoirLayer is unknown (source not provided); spectral-norm scaling used.
    v = jnp.ones((w.shape[1],), jnp.float32) / math.sqrt(w.shape[1])

    def body(_, v):
        u = w @ v
        u = u / (jnp.linalg.norm(u) + 1e-9)
        v = w.T @ u
        return v / (jnp.linalg.norm(v) + 1e-9)

    v = lax.fori_loop(0, iters, body, v)
    return jnp.linalg.norm(w @ v)


def _block_diag(a, b):
    za = jnp.zeros((a.shape[0], b.shape[1]), a.dtype)
    zb = jnp.zeros((b.shape[0], a.shape[1]), a.dtype)
    return jnp.concatenate(
        [jnp.concatenate([a, za], axis=1),
         jnp.concatenate([zb, b], axis=1)], axis=0)


def _init_single_reservoir(key, dim, units):
    k_sign, k_wout, k_bout = jax.random.split(key, 3)
    # CRJ-style input weights: fixed magnitude, pseudo-random signs
    signs = jnp.where(jax.random.uniform(k_sign, (dim, units)) < 0.5, -1.0, 1.0)
    w_in = (signs * CONNECTION_WEIGHT * INPUT_SCALING).astype(jnp.float32)
    # cycle + jumps recurrent topology, rescaled toward the target spectral radius
    idx = jnp.arange(units)
    w_hat = jnp.zeros((units, units), jnp.float32)
    w_hat = w_hat.at[idx, (idx + 1) % units].set(CYCLE_WEIGHT)
    jsrc = jnp.arange(0, units, JUMP_SIZE)
    w_hat = w_hat.at[jsrc, (jsrc + JUMP_SIZE) % units].add(JUMP_WEIGHT)
    w_hat = w_hat * (SPECTRAL_RADIUS / (_spectral_norm_estimate(w_hat) + 1e-9))
    lim = 1.0 / math.sqrt(units)
    w_out = jax.random.uniform(k_wout, (units, dim), jnp.float32, -lim, lim)
    b_out = jax.random.uniform(k_bout, (1, dim), jnp.float32, -lim, lim)
    return w_in, w_hat, w_out, b_out


def _init_single_ff(key, dim, hidden):
    d2 = dim * 2
    k1, k2, k3, k4 = jax.random.split(key, 4)
    l1, l2 = 1.0 / math.sqrt(d2), 1.0 / math.sqrt(hidden)
    return dict(
        ln_g=jnp.ones((1, d2), jnp.float32),
        ln_b=jnp.zeros((1, d2), jnp.float32),
        w1=jax.random.uniform(k1, (d2, hidden), jnp.float32, -l1, l1),
        b1=jax.random.uniform(k2, (1, hidden), jnp.float32, -l1, l1),
        w2=jax.random.uniform(k3, (hidden, d2), jnp.float32, -l2, l2),
        b2=jax.random.uniform(k4, (1, d2), jnp.float32, -l2, l2),
    )


def init_params(key, dim, units, hidden, depth):
    per = {k: [] for k in _W_ORDER}
    for _ in range(depth):
        kr1, kr2, kff, key = jax.random.split(key, 4)
        w_in1, w_hat1, w_out1, b_out1 = _init_single_reservoir(kr1, dim, units)
        w_in2, w_hat2, w_out2, b_out2 = _init_single_reservoir(kr2, dim, units)
        ff = _init_single_ff(kff, dim, hidden)
        # Block-diagonal packing merges the two independent reservoir streams
        # into a single 2U-wide recurrence (one 256-wide MXU matmul per serial
        # step on v6e/v7x).  For the real U~1000 keep the two streams separate
        # instead -- the zero blocks would be 2x real FLOPs there.
        per["w_in"].append(_block_diag(w_in1, w_in2))      # (2D, 2U)
        per["w_hat"].append(_block_diag(w_hat1, w_hat2))   # (2U, 2U)
        per["w_out"].append(_block_diag(w_out1, w_out2))   # (2U, 2D)
        per["b_out"].append(jnp.concatenate([b_out1, b_out2], axis=1))  # (1, 2D)
        for k in ("ln_g", "ln_b", "w1", "b1", "w2", "b2"):
            per[k].append(ff[k])
    return {k: jnp.stack(v, axis=0) for k, v in per.items()}


if __name__ == "__main__":
    key = jax.random.PRNGKey(0)
    kx1, kx2, kp = jax.random.split(key, 3)
    x1 = jax.random.normal(kx1, (BATCH, SEQ, DIM), jnp.float32)
    x2 = jax.random.normal(kx2, (BATCH, SEQ, DIM), jnp.float32)
    params = init_params(kp, DIM, UNITS, MLP_DIM, DEPTH)

    out = reservoir_forward(params, x1, x2)
    out = jax.block_until_ready(out)
    assert out.shape == (BATCH, 2 * DIM) and out.dtype == jnp.float32
    assert bool(jnp.all(jnp.isfinite(out)))
    print("KERNEL_OK")
</pallas_src>

<mosaic_0001>
module attributes {stable_mosaic.version = 11 : i64} {
  func.func @_fused_layer_kernel(%arg0: i32, %arg1: i32, %arg2: memref<8x8x256xbf16, #tpu.memory_space<vmem>>, %arg3: memref<1x256x256xbf16, #tpu.memory_space<vmem>>, %arg4: memref<1x256x256xbf16, #tpu.memory_space<vmem>>, %arg5: memref<1x256x256xbf16, #tpu.memory_space<vmem>>, %arg6: memref<1x1x256xf32, #tpu.memory_space<vmem>>, %arg7: memref<1x1x256xf32, #tpu.memory_space<vmem>>, %arg8: memref<1x1x256xf32, #tpu.memory_space<vmem>>, %arg9: memref<1x256x128xbf16, #tpu.memory_space<vmem>>, %arg10: memref<1x1x128xf32, #tpu.memory_space<vmem>>, %arg11: memref<1x128x256xbf16, #tpu.memory_space<vmem>>, %arg12: memref<1x1x256xf32, #tpu.memory_space<vmem>>, %arg13: memref<8x256xf32, #tpu.memory_space<vmem>>) attributes {dimension_semantics = [#tpu.dimension_semantics<parallel>, #tpu.dimension_semantics<arbitrary>], iteration_bounds = array<i64: 2, 2>, scalar_prefetch = 0 : i64, scratch_operands = 0 : i64, tpu.core_type = #tpu.core_type<tc>, window_params = [{transform_indices = @transform_0, window_bounds = array<i64: 8, 8, 256>}, {transform_indices = @transform_1, window_bounds = array<i64: 1, 256, 256>}, {transform_indices = @transform_2, window_bounds = array<i64: 1, 256, 256>}, {transform_indices = @transform_3, window_bounds = array<i64: 1, 256, 256>}, {transform_indices = @transform_4, window_bounds = array<i64: 1, 1, 256>}, {transform_indices = @transform_5, window_bounds = array<i64: 1, 1, 256>}, {transform_indices = @transform_6, window_bounds = array<i64: 1, 1, 256>}, {transform_indices = @transform_7, window_bounds = array<i64: 1, 256, 128>}, {transform_indices = @transform_8, window_bounds = array<i64: 1, 1, 128>}, {transform_indices = @transform_9, window_bounds = array<i64: 1, 128, 256>}, {transform_indices = @transform_10, window_bounds = array<i64: 1, 1, 256>}, {transform_indices = @transform_11, window_bounds = array<i64: 8, 256>}]} {
    %c0 = arith.constant 0 : index
    %c0_0 = arith.constant 0 : index
    %c0_1 = arith.constant 0 : index
    %0 = vector.load %arg2[%c0, %c0_0, %c0_1] : memref<8x8x256xbf16, #tpu.memory_space<vmem>>, vector<8x8x256xbf16>
    %1 = vector.shape_cast %0 : vector<8x8x256xbf16> to vector<64x256xbf16>
    %c0_2 = arith.constant 0 : index
    %c0_3 = arith.constant 0 : index
    %c0_4 = arith.constant 0 : index
    %2 = vector.load %arg3[%c0_2, %c0_3, %c0_4] : memref<1x256x256xbf16, #tpu.memory_space<vmem>>, vector<1x256x256xbf16>
    %3 = vector.shape_cast %2 : vector<1x256x256xbf16> to vector<256x256xbf16>
    %cst = arith.constant dense<0.000000e+00> : vector<64x256xf32>
    %4 = tpu.matmul %1, %3, %cst {dimension_numbers = #tpu.dot_dimension_numbers<[1], [0], [0], [1], [0, 0, 1, 1], [], []>} : vector<64x256xbf16>, vector<256x256xbf16>, vector<64x256xf32> -> vector<64x256xf32>
    %c0_5 = arith.constant 0 : index
    %c0_6 = arith.constant 0 : index
    %c0_7 = arith.constant 0 : index
    %5 = vector.load %arg4[%c0_5, %c0_6, %c0_7] : memref<1x256x256xbf16, #tpu.memory_space<vmem>>, vector<1x256x256xbf16>
    %6 = vector.shape_cast %5 : vector<1x256x256xbf16> to vector<256x256xbf16>
    %7 = vector.extract_strided_slice %4 {offsets = [0, 0], sizes = [8, 256], strides = [1, 1]} : vector<64x256xf32> to vector<8x256xf32>
    %8 = math.tanh %7 : vector<8x256xf32>
    %9 = vector.extract_strided_slice %4 {offsets = [8, 0], sizes = [8, 256], strides = [1, 1]} : vector<64x256xf32> to vector<8x256xf32>
    %10 = arith.truncf %8 : vector<8x256xf32> to vector<8x256xbf16>
    %cst_8 = arith.constant dense<0.000000e+00> : vector<8x256xf32>
    %11 = tpu.matmul %10, %6, %cst_8 {dimension_numbers = #tpu.dot_dimension_numbers<[1], [0], [0], [1], [0, 0, 1, 1], [], []>} : vector<8x256xbf16>, vector<256x256xbf16>, vector<8x256xf32> -> vector<8x256xf32>
    %12 = arith.addf %9, %11 : vector<8x256xf32>
    %13 = math.tanh %12 : vector<8x256xf32>
    %14 = vector.extract_strided_slice %4 {offsets = [16, 0], sizes = [8, 256], strides = [1, 1]} : vector<64x256xf32> to vector<8x256xf32>
    %15 = arith.truncf %13 : vector<8x256xf32> to vector<8x256xbf16>
    %cst_9 = arith.constant dense<0.000000e+00> : vector<8x256xf32>
    %16 = tpu.matmul %15, %6, %cst_9 {dimension_numbers = #tpu.dot_dimension_numbers<[1], [0], [0], [1], [0, 0, 1, 1], [], []>} : vector<8x256xbf16>, vector<256x256xbf16>, vector<8x256xf32> -> vector<8x256xf32>
    %17 = arith.addf %14, %16 : vector<8x256xf32>
    %18 = math.tanh %17 : vector<8x256xf32>
    %19 = vector.extract_strided_slice %4 {offsets = [24, 0], sizes = [8, 256], strides = [1, 1]} : vector<64x256xf32> to vector<8x256xf32>
    %20 = arith.truncf %18 : vector<8x256xf32> to vector<8x256xbf16>
    %cst_10 = arith.constant dense<0.000000e+00> : vector<8x256xf32>
    %21 = tpu.matmul %20, %6, %cst_10 {dimension_numbers = #tpu.dot_dimension_numbers<[1], [0], [0], [1], [0, 0, 1, 1], [], []>} : vector<8x256xbf16>, vector<256x256xbf16>, vector<8x256xf32> -> vector<8x256xf32>
    %22 = arith.addf %19, %21 : vector<8x256xf32>
    %23 = math.tanh %22 : vector<8x256xf32>
    %24 = vector.extract_strided_slice %4 {offsets = [32, 0], sizes = [8, 256], strides = [1, 1]} : vector<64x256xf32> to vector<8x256xf32>
    %25 = arith.truncf %23 : vector<8x256xf32> to vector<8x256xbf16>
    %cst_11 = arith.constant dense<0.000000e+00> : vector<8x256xf32>
    %26 = tpu.matmul %25, %6, %cst_11 {dimension_numbers = #tpu.dot_dimension_numbers<[1], [0], [0], [1], [0, 0, 1, 1], [], []>} : vector<8x256xbf16>, vector<256x256xbf16>, vector<8x256xf32> -> vector<8x256xf32>
    %27 = arith.addf %24, %26 : vector<8x256xf32>
    %28 = math.tanh %27 : vector<8x256xf32>
    %29 = vector.extract_strided_slice %4 {offsets = [40, 0], sizes = [8, 256], strides = [1, 1]} : vector<64x256xf32> to vector<8x256xf32>
    %30 = arith.truncf %28 : vector<8x256xf32> to vector<8x256xbf16>
    %cst_12 = arith.constant dense<0.000000e+00> : vector<8x256xf32>
    %31 = tpu.matmul %30, %6, %cst_12 {dimension_numbers = #tpu.dot_dimension_numbers<[1], [0], [0], [1], [0, 0, 1, 1], [], []>} : vector<8x256xbf16>, vector<256x256xbf16>, vector<8x256xf32> -> vector<8x256xf32>
    %32 = arith.addf %29, %31 : vector<8x256xf32>
    %33 = math.tanh %32 : vector<8x256xf32>
    %34 = vector.extract_strided_slice %4 {offsets = [48, 0], sizes = [8, 256], strides = [1, 1]} : vector<64x256xf32> to vector<8x256xf32>
    %35 = arith.truncf %33 : vector<8x256xf32> to vector<8x256xbf16>
    %cst_13 = arith.constant dense<0.000000e+00> : vector<8x256xf32>
    %36 = tpu.matmul %35, %6, %cst_13 {dimension_numbers = #tpu.dot_dimension_numbers<[1], [0], [0], [1], [0, 0, 1, 1], [], []>} : vector<8x256xbf16>, vector<256x256xbf16>, vector<8x256xf32> -> vector<8x256xf32>
    %37 = arith.addf %34, %36 : vector<8x256xf32>
    %38 = math.tanh %37 : vector<8x256xf32>
    %39 = vector.extract_strided_slice %4 {offsets = [56, 0], sizes = [8, 256], strides = [1, 1]} : vector<64x256xf32> to vector<8x256xf32>
    %40 = arith.truncf %38 : vector<8x256xf32> to vector<8x256xbf16>
    %cst_14 = arith.constant dense<0.000000e+00> : vector<8x256xf32>
    %41 = tpu.matmul %40, %6, %cst_14 {dimension_numbers = #tpu.dot_dimension_numbers<[1], [0], [0], [1], [0, 0, 1, 1], [], []>} : vector<8x256xbf16>, vector<256x256xbf16>, vector<8x256xf32> -> vector<8x256xf32>
    %42 = arith.addf %39, %41 : vector<8x256xf32>
    %43 = math.tanh %42 : vector<8x256xf32>
    %c0_15 = arith.constant 0 : index
    %c0_16 = arith.constant 0 : index
    %c0_17 = arith.constant 0 : index
    %44 = vector.load %arg5[%c0_15, %c0_16, %c0_17] : memref<1x256x256xbf16, #tpu.memory_space<vmem>>, vector<1x256x256xbf16>
    %45 = vector.shape_cast %44 : vector<1x256x256xbf16> to vector<256x256xbf16>
    %46 = arith.truncf %43 : vector<8x256xf32> to vector<8x256xbf16>
    %cst_18 = arith.constant dense<0.000000e+00> : vector<8x256xf32>
    %47 = tpu.matmul %46, %45, %cst_18 {dimension_numbers = #tpu.dot_dimension_numbers<[1], [0], [0], [1], [0, 0, 1, 1], [], []>} : vector<8x256xbf16>, vector<256x256xbf16>, vector<8x256xf32> -> vector<8x256xf32>
    %c0_19 = arith.constant 0 : index
    %c0_20 = arith.constant 0 : index
    %c0_21 = arith.constant 0 : index
    %48 = vector.load %arg6[%c0_19, %c0_20, %c0_21] : memref<1x1x256xf32, #tpu.memory_space<vmem>>, vector<1x1x256xf32>
    %49 = vector.shape_cast %48 : vector<1x1x256xf32> to vector<1x256xf32>
    %50 = vector.broadcast %49 : vector<1x256xf32> to vector<8x256xf32>
    %51 = arith.addf %47, %50 : vector<8x256xf32>
    %cst_22 = arith.constant dense<0.000000e+00> : vector<8xf32>
    %52 = vector.multi_reduction <add>, %51, %cst_22 [1] : vector<8x256xf32> to vector<8xf32>
    %53 = vector.shape_cast %52 : vector<8xf32> to vector<8x1xf32>
    %cst_23 = arith.constant 2.560000e+02 : f32
    %54 = vector.broadcast %cst_23 : f32 to vector<8x1xf32>
    %55 = arith.divf %53, %54 : vector<8x1xf32>
    %56 = vector.broadcast %55 : vector<8x1xf32> to vector<8x256xf32>
    %57 = arith.subf %51, %56 : vector<8x256xf32>
    %58 = arith.mulf %57, %57 : vector<8x256xf32>
    %cst_24 = arith.constant dense<0.000000e+00> : vector<8xf32>
    %59 = vector.multi_reduction <add>, %58, %cst_24 [1] : vector<8x256xf32> to vector<8xf32>
    %60 = vector.shape_cast %59 : vector<8xf32> to vector<8x1xf32>
    %cst_25 = arith.constant 2.560000e+02 : f32
    %61 = vector.broadcast %cst_25 : f32 to vector<8x1xf32>
    %62 = arith.divf %60, %61 : vector<8x1xf32>
    %63 = vector.broadcast %55 : vector<8x1xf32> to vector<8x256xf32>
    %64 = arith.subf %51, %63 : vector<8x256xf32>
    %cst_26 = arith.constant 9.99999974E-6 : f32
    %65 = vector.broadcast %cst_26 : f32 to vector<8x1xf32>
    %66 = arith.addf %62, %65 : vector<8x1xf32>
    %67 = math.rsqrt %66 : vector<8x1xf32>
    %68 = vector.broadcast %67 : vector<8x1xf32> to vector<8x256xf32>
    %69 = arith.mulf %64, %68 : vector<8x256xf32>
    %c0_27 = arith.constant 0 : index
    %c0_28 = arith.constant 0 : index
    %c0_29 = arith.constant 0 : index
    %70 = vector.load %arg7[%c0_27, %c0_28, %c0_29] : memref<1x1x256xf32, #tpu.memory_space<vmem>>, vector<1x1x256xf32>
    %71 = vector.shape_cast %70 : vector<1x1x256xf32> to vector<1x256xf32>
    %72 = vector.broadcast %71 : vector<1x256xf32> to vector<8x256xf32>
    %73 = arith.mulf %69, %72 : vector<8x256xf32>
    %c0_30 = arith.constant 0 : index
    %c0_31 = arith.constant 0 : index
    %c0_32 = arith.constant 0 : index
    %74 = vector.load %arg8[%c0_30, %c0_31, %c0_32] : memref<1x1x256xf32, #tpu.memory_space<vmem>>, vector<1x1x256xf32>
    %75 = vector.shape_cast %74 : vector<1x1x256xf32> to vector<1x256xf32>
    %76 = vector.broadcast %75 : vector<1x256xf32> to vector<8x256xf32>
    %77 = arith.addf %73, %76 : vector<8x256xf32>
    %c0_33 = arith.constant 0 : index
    %c0_34 = arith.constant 0 : index
    %c0_35 = arith.constant 0 : index
    %78 = vector.load %arg9[%c0_33, %c0_34, %c0_35] : memref<1x256x128xbf16, #tpu.memory_space<vmem>>, vector<1x256x128xbf16>
    %79 = vector.shape_cast %78 : vector<1x256x128xbf16> to vector<256x128xbf16>
    %80 = arith.truncf %77 : vector<8x256xf32> to vector<8x256xbf16>
    %cst_36 = arith.constant dense<0.000000e+00> : vector<8x128xf32>
    %81 = tpu.matmul %80, %79, %cst_36 {dimension_numbers = #tpu.dot_dimension_numbers<[1], [0], [0], [1], [0, 0, 1, 1], [], []>} : vector<8x256xbf16>, vector<256x128xbf16>, vector<8x128xf32> -> vector<8x128xf32>
    %c0_37 = arith.constant 0 : index
    %c0_38 = arith.constant 0 : index
    %c0_39 = arith.constant 0 : index
    %82 = vector.load %arg10[%c0_37, %c0_38, %c0_39] : memref<1x1x128xf32, #tpu.memory_space<vmem>>, vector<1x1x128xf32>
    %83 = vector.shape_cast %82 : vector<1x1x128xf32> to vector<1x128xf32>
    %84 = vector.broadcast %83 : vector<1x128xf32> to vector<8x128xf32>
    %85 = arith.addf %81, %84 : vector<8x128xf32>
    %cst_40 = arith.constant 5.000000e-01 : f32
    %86 = vector.broadcast %cst_40 : f32 to vector<8x128xf32>
    %87 = arith.mulf %86, %85 : vector<8x128xf32>
    %cst_41 = arith.constant 4.471500e-02 : f32
    %88 = vector.broadcast %cst_41 : f32 to vector<8x128xf32>
    %89 = arith.mulf %88, %85 : vector<8x128xf32>
    %90 = arith.mulf %89, %85 : vector<8x128xf32>
    %91 = arith.mulf %90, %85 : vector<8x128xf32>
    %92 = arith.addf %85, %91 : vector<8x128xf32>
    %cst_42 = arith.constant 0.797884583 : f32
    %93 = vector.broadcast %cst_42 : f32 to vector<8x128xf32>
    %94 = arith.mulf %93, %92 : vector<8x128xf32>
    %95 = math.tanh %94 : vector<8x128xf32>
    %cst_43 = arith.constant 1.000000e+00 : f32
    %96 = vector.broadcast %cst_43 : f32 to vector<8x128xf32>
    %97 = arith.addf %96, %95 : vector<8x128xf32>
    %98 = arith.mulf %87, %97 : vector<8x128xf32>
    %c0_44 = arith.constant 0 : index
    %c0_45 = arith.constant 0 : index
    %c0_46 = arith.constant 0 : index
    %99 = vector.load %arg11[%c0_44, %c0_45, %c0_46] : memref<1x128x256xbf16, #tpu.memory_space<vmem>>, vector<1x128x256xbf16>
    %100 = vector.shape_cast %99 : vector<1x128x256xbf16> to vector<128x256xbf16>
    %101 = arith.truncf %98 : vector<8x128xf32> to vector<8x128xbf16>
    %cst_47 = arith.constant dense<0.000000e+00> : vector<8x256xf32>
    %102 = tpu.matmul %101, %100, %cst_47 {dimension_numbers = #tpu.dot_dimension_numbers<[1], [0], [0], [1], [0, 0, 1, 1], [], []>} : vector<8x128xbf16>, vector<128x256xbf16>, vector<8x256xf32> -> vector<8x256xf32>
    %c0_48 = arith.constant 0 : index
    %c0_49 = arith.constant 0 : index
    %c0_50 = arith.constant 0 : index
    %103 = vector.load %arg12[%c0_48, %c0_49, %c0_50] : memref<1x1x256xf32, #tpu.memory_space<vmem>>, vector<1x1x256xf32>
    %104 = vector.shape_cast %103 : vector<1x1x256xf32> to vector<1x256xf32>
    %105 = vector.broadcast %104 : vector<1x256xf32> to vector<8x256xf32>
    %106 = arith.addf %102, %105 : vector<8x256xf32>
    %107 = arith.addf %106, %51 : vector<8x256xf32>
    %c0_i32 = arith.constant 0 : i32
    %108 = arith.cmpi eq, %arg1, %c0_i32 : i32
    %109 = arith.extui %108 : i1 to i32
    %c0_i32_51 = arith.constant 0 : i32
    %110 = arith.cmpi ne, %109, %c0_i32_51 : i32
    scf.if %110 {
      %cst_57 = arith.constant 0.000000e+00 : f32
      %117 = vector.broadcast %cst_57 : f32 to vector<8x256xf32>
      %c0_58 = arith.constant 0 : index
      %c0_59 = arith.constant 0 : index
      %118 = vector.load %arg13[%c0_58, %c0_59] : memref<8x256xf32, #tpu.memory_space<vmem>>, vector<8x256xf32>
      tpu.vector_store %arg13[%c0_58, %c0_59], %117 {strides = array<i32>} : memref<8x256xf32, #tpu.memory_space<vmem>>, vector<8x256xf32>,
    } else {
    }
    %c0_52 = arith.constant 0 : index
    %c0_53 = arith.constant 0 : index
    %111 = vector.load %arg13[%c0_52, %c0_53] : memref<8x256xf32, #tpu.memory_space<vmem>>, vector<8x256xf32>
    %112 = arith.addf %111, %107 : vector<8x256xf32>
    %c0_54 = arith.constant 0 : index
    %c0_55 = arith.constant 0 : index
    %113 = vector.load %arg13[%c0_54, %c0_55] : memref<8x256xf32, #tpu.memory_space<vmem>>, vector<8x256xf32>
    tpu.vector_store %arg13[%c0_54, %c0_55], %112 {strides = array<i32>} : memref<8x256xf32, #tpu.memory_space<vmem>>, vector<8x256xf32>,
    %c1_i32 = arith.constant 1 : i32
    %114 = arith.cmpi eq, %arg1, %c1_i32 : i32
    %115 = arith.extui %114 : i1 to i32
    %c0_i32_56 = arith.constant 0 : i32
    %116 = arith.cmpi ne, %115, %c0_i32_56 : i32
    scf.if %116 {
      %c0_57 = arith.constant 0 : index
      %c0_58 = arith.constant 0 : index
      %117 = vector.load %arg13[%c0_57, %c0_58] : memref<8x256xf32, #tpu.memory_space<vmem>>, vector<8x256xf32>
      %cst_59 = arith.constant 5.000000e-01 : f32
      %118 = vector.broadcast %cst_59 : f32 to vector<8x256xf32>
      %119 = arith.mulf %117, %118 : vector<8x256xf32>
      %c0_60 = arith.constant 0 : index
      %c0_61 = arith.constant 0 : index
      %120 = vector.load %arg13[%c0_60, %c0_61] : memref<8x256xf32, #tpu.memory_space<vmem>>, vector<8x256xf32>
      tpu.vector_store %arg13[%c0_60, %c0_61], %119 {strides = array<i32>} : memref<8x256xf32, #tpu.memory_space<vmem>>, vector<8x256xf32>,
    } else {
    }
    return
  }
  func.func @transform_0(%arg0: i32, %arg1: i32) -> (i32, i32, i32) {
    %c0_i32 = arith.constant 0 : i32
    %c0_i32_0 = arith.constant 0 : i32
    %c0_i32_1 = arith.constant 0 : i32
    return %c0_i32, %arg0, %c0_i32_0 : i32, i32, i32
  }
  func.func @transform_1(%arg0: i32, %arg1: i32) -> (i32, i32, i32) {
    %c0_i32 = arith.constant 0 : i32
    %c0_i32_0 = arith.constant 0 : i32
    %c0_i32_1 = arith.constant 0 : i32
    return %arg1, %c0_i32, %c0_i32_0 : i32, i32, i32
  }
  func.func @transform_2(%arg0: i32, %arg1: i32) -> (i32, i32, i32) {
    %c0_i32 = arith.constant 0 : i32
    %c0_i32_0 = arith.constant 0 : i32
    %c0_i32_1 = arith.constant 0 : i32
    return %arg1, %c0_i32, %c0_i32_0 : i32, i32, i32
  }
  func.func @transform_3(%arg0: i32, %arg1: i32) -> (i32, i32, i32) {
    %c0_i32 = arith.constant 0 : i32
    %c0_i32_0 = arith.constant 0 : i32
    %c0_i32_1 = arith.constant 0 : i32
    return %arg1, %c0_i32, %c0_i32_0 : i32, i32, i32
  }
  func.func @transform_4(%arg0: i32, %arg1: i32) -> (i32, i32, i32) {
    %c0_i32 = arith.constant 0 : i32
    %c0_i32_0 = arith.constant 0 : i32
    %c0_i32_1 = arith.constant 0 : i32
    return %arg1, %c0_i32, %c0_i32_0 : i32, i32, i32
  }
  func.func @transform_5(%arg0: i32, %arg1: i32) -> (i32, i32, i32) {
    %c0_i32 = arith.constant 0 : i32
    %c0_i32_0 = arith.constant 0 : i32
    %c0_i32_1 = arith.constant 0 : i32
    return %arg1, %c0_i32, %c0_i32_0 : i32, i32, i32
  }
  func.func @transform_6(%arg0: i32, %arg1: i32) -> (i32, i32, i32) {
    %c0_i32 = arith.constant 0 : i32
    %c0_i32_0 = arith.constant 0 : i32
    %c0_i32_1 = arith.constant 0 : i32
    return %arg1, %c0_i32, %c0_i32_0 : i32, i32, i32
  }
  func.func @transform_7(%arg0: i32, %arg1: i32) -> (i32, i32, i32) {
    %c0_i32 = arith.constant 0 : i32
    %c0_i32_0 = arith.constant 0 : i32
    %c0_i32_1 = arith.constant 0 : i32
    return %arg1, %c0_i32, %c0_i32_0 : i32, i32, i32
  }
  func.func @transform_8(%arg0: i32, %arg1: i32) -> (i32, i32, i32) {
    %c0_i32 = arith.constant 0 : i32
    %c0_i32_0 = arith.constant 0 : i32
    %c0_i32_1 = arith.constant 0 : i32
    return %arg1, %c0_i32, %c0_i32_0 : i32, i32, i32
  }
  func.func @transform_9(%arg0: i32, %arg1: i32) -> (i32, i32, i32) {
    %c0_i32 = arith.constant 0 : i32
    %c0_i32_0 = arith.constant 0 : i32
    %c0_i32_1 = arith.constant 0 : i32
    return %arg1, %c0_i32, %c0_i32_0 : i32, i32, i32
  }
  func.func @transform_10(%arg0: i32, %arg1: i32) -> (i32, i32, i32) {
    %c0_i32 = arith.constant 0 : i32
    %c0_i32_0 = arith.constant 0 : i32
    %c0_i32_1 = arith.constant 0 : i32
    return %arg1, %c0_i32, %c0_i32_0 : i32, i32, i32
  }
  func.func @transform_11(%arg0: i32, %arg1: i32) -> (i32, i32) {
    %c0_i32 = arith.constant 0 : i32
    %c0_i32_0 = arith.constant 0 : i32
    return %arg0, %c0_i32 : i32, i32
  }
}

</mosaic_0001>

<llo_original>
// kernel: tpu_custom_call.1
$region0: #{tpu_custom_call.1}
  #allocation0 [shape = 'u32[]', space=smem, size = 0x4, offset = 0x4, fixed_abs, tag = 'smem constant byte address 0x4 - core index']
  #allocation1 [shape = 'u32[144,128]{1,0:T(1,128)}', space=vmem, size = 0x12000, scoped, tag = 'internal scratch']
  %s0 = inlined_call_operand.hbm [shape: bf16[8,16,256], index: 0, kind: input, shape index: {}]
  %s1 = inlined_call_operand.hbm [shape: bf16[2,256,256], index: 1, kind: input, shape index: {}]
  %s2 = inlined_call_operand.hbm [shape: bf16[2,256,256], index: 2, kind: input, shape index: {}]
  %s3 = inlined_call_operand.hbm [shape: bf16[2,256,256], index: 3, kind: input, shape index: {}]
  %s4 = inlined_call_operand.vmem [shape: f32[2,1,256], index: 4, kind: input, shape index: {}]
  %s5 = inlined_call_operand.vmem [shape: f32[2,1,256], index: 5, kind: input, shape index: {}]
  %s6 = inlined_call_operand.hbm [shape: f32[2,1,256], index: 6, kind: input, shape index: {}]
  %s7 = inlined_call_operand.hbm [shape: bf16[2,256,128], index: 7, kind: input, shape index: {}]
  %s8 = inlined_call_operand.vmem [shape: f32[2,1,128], index: 8, kind: input, shape index: {}]
  %s9 = inlined_call_operand.hbm [shape: bf16[2,128,256], index: 9, kind: input, shape index: {}]
  %s10 = inlined_call_operand.vmem [shape: f32[2,1,256], index: 10, kind: input, shape index: {}]
  %s11 = inlined_call_operand.hbm [shape: f32[16,256], index: 11, kind: output, shape index: {}]
  %s12 = sld [smem:[#allocation0]]
  $region113: #{tpu_custom_call.1} parent=0
    _
  %s14 = ssub.s32 1, %s12
  %s15 = scalar_select 0, %s14, %s12
  $region1: #{tpu_custom_call.1} parent=0
    #allocation2 [shape = 'u8[65536]{0}', space=vmem, size = 0x10000, scoped, tag = 'input window, operand 0']
    #allocation3 [shape = 's32[2]{0}', space=sflag, size = 0x8, scoped, tag = 'scoped memory for tpu_custom_call.1']
    #allocation4 [shape = 's32[2]{0}', space=sflag, size = 0x8, scoped, tag = 'scoped memory for tpu_custom_call.1']
    #allocation5 [shape = 'u8[262144]{0}', space=vmem, size = 0x40000, scoped, tag = 'input window, operand 1']
    #allocation6 [shape = 's32[2]{0}', space=sflag, size = 0x8, scoped, tag = 'scoped memory for tpu_custom_call.1']
    #allocation7 [shape = 'u8[262144]{0}', space=vmem, size = 0x40000, scoped, tag = 'input window, operand 2']
    #allocation8 [shape = 'u8[262144]{0}', space=vmem, size = 0x40000, scoped, tag = 'input window, operand 3']
    #allocation9 [shape = 's32[2]{0}', space=sflag, size = 0x8, scoped, tag = 'scoped memory for tpu_custom_call.1']
    #allocation10 [shape = 'u8[2048]{0}', space=vmem, size = 0x800, scoped, tag = 'input window, operand 6']
    #allocation11 [shape = 'u8[131072]{0}', space=vmem, size = 0x20000, scoped, tag = 'input window, operand 7']
    #allocation12 [shape = 's32[2]{0}', space=sflag, size = 0x8, scoped, tag = 'scoped memory for tpu_custom_call.1']
    #allocation13 [shape = 'u8[131072]{0}', space=vmem, size = 0x20000, scoped, tag = 'input window, operand 9']
    #allocation14 [shape = 'u8[16384]{0}', space=vmem, size = 0x4000, scoped, tag = 'output window, operand 0']
    %16 = vsyncpa [#allocation3], 0
    %s17 = scalar_lea.sflag [#allocation3], 1
    %18 = vsyncpa %s17, 0
    %19 = vsyncpa [#allocation6], 0
    %s20 = scalar_lea.sflag [#allocation6], 1
    %21 = vsyncpa %s20, 0
    %22 = vsyncpa [#allocation9], 0
    %s23 = scalar_lea.sflag [#allocation9], 1
    %24 = vsyncpa %s23, 0
    %25 = vsyncpa [#allocation12], 0
    %s26 = scalar_lea.sflag [#allocation12], 1
    %27 = vsyncpa %s26, 0
    %28 = vsyncpa [#allocation4], 0
    %s29 = scalar_lea.sflag [#allocation4], 1
    %30 = vsyncpa %s29, 0
    loop: start=0, step=1, limit=6
    $region2: #{tpu_custom_call.1} parent=1 // loop_pre_header
      _
    $region3: #{tpu_custom_call.1} parent=1 // loop_header
      %s32 = sphi 0, %s36
      %p33 = scmp.ge.s32.totalorder %s32, 6
      %s39 = sphi 0, %s51
      %s40 = sphi 0, %s47
      %s41 = sphi 0, %s39
      %s42 = sphi 0, %s40
      %s43 = sphi 0, %s41
      %s44 = sphi 0, %s42
      %s54 = sphi 0, %s56
      %s57 = sphi 0, %s54
      %s58 = sphi 0, %s57
      %s74 = sphi 0, %s58
      %s80 = sphi 0, %s82
      %s83 = sphi 0, %s80
      %s84 = sphi 0, %s83
      %s100 = sphi 0, %s84
      %s106 = sphi 0, %s108
      %s109 = sphi 0, %s106
      %s110 = sphi 0, %s109
      %s126 = sphi 0, %s110
      %s132 = sphi 0, %s134
      %s135 = sphi 0, %s132
      %s136 = sphi 0, %s135
      %s152 = sphi 0, %s136
      %s158 = sphi 0, %s160
      %s161 = sphi 0, %s158
      %s162 = sphi 0, %s161
      %s178 = sphi 0, %s162
      %s184 = sphi 0, %s186
      %s187 = sphi 0, %s184
      %s188 = sphi 0, %s187
      %s204 = sphi 0, %s188
      %s210 = sphi 0, %s212
      %s213 = sphi 0, %s210
      %s214 = sphi 0, %s213
      %s230 = sphi 0, %s214
      %s236 = sphi 0, %s238
      %s239 = sphi 0, %s236
      %s240 = sphi 0, %s239
      %s256 = sphi 0, %s240
      %s262 = sphi 0, %s264
      %s265 = sphi 0, %s262
      %s266 = sphi 0, %s265
      %s282 = sphi 0, %s266
      %s288 = sphi 0, %s290
      %s291 = sphi 0, %s288
      %s292 = sphi 0, %s291
      %s308 = sphi 0, %s292
      %s314 = sphi 0, %s316
      %s317 = sphi 0, %s314
      %s318 = sphi 0, %s317
      %s334 = sphi 0, %s318
      %s340 = sphi 0, %s342
      %s343 = sphi 0, %s340
      %s344 = sphi 0, %s343
      %s360 = sphi 0, %s344
    $region4: #{tpu_custom_call.1} parent=1 // loop_header_branch
      %35 = sbr.rel (%p33) target = $region8
    $region5: #{tpu_custom_call.1} parent=1 // loop_body
      %s37 = ssub.s32 %s32, 1
      %s38 = ssub.s32 %s32, 2
      %s45 = sadd.s32 1, %s40
      %p46 = scmp.ge.s32.totalorder %s45, 2
      %s47 = scalar_select %p46, 0, %s45
      %s48 = sadd.s32 1, %s39
      %s49 = scalar_select %p46, %s48, %s39
      %p50 = scmp.ge.s32.totalorder %s49, 2
      %s51 = scalar_select %p50, 0, %s49
      %s52 = ssub.s32 %s39, %s51
      %p53 = scmp.eq.s32.totalorder %s52, 0
      %s55 = sadd.s32 %s54, 1
      %s56 = scalar_select %p53, %s54, %s55
      %p59 = pneg %p53
      %p60 = scmp.eq.s32.totalorder %s32, 3
      %p61 = por %p59, %p60
      %p62 = scmp.ne.s32.totalorder %s54, %s57
      %p63 = scmp.eq.s32.totalorder %s32, 0
      %p64 = por %p62, %p63
      %p65 = scmp.ne.s32.totalorder %s54, %s57
      %p66 = scmp.eq.s32.totalorder %s37, 3
      %p67 = por %p65, %p66
      %p68 = scmp.ne.s32.totalorder %s57, %s58
      %p69 = scmp.eq.s32.totalorder %s37, 0
      %p70 = por %p68, %p69
      %p71 = scmp.ne.s32.totalorder %s57, %s58
      %p72 = scmp.eq.s32.totalorder %s38, 3
      %p73 = por %p71, %p72
      %p75 = scmp.ne.s32.totalorder %s58, %s74
      %p76 = scmp.eq.s32.totalorder %s38, 0
      %p77 = por %p75, %p76
      %s78 = ssub.s32 %s40, %s47
      %p79 = scmp.eq.s32.totalorder %s78, 0
      %s81 = sadd.s32 %s80, 1
      %s82 = scalar_select %p79, %s80, %s81
      %p85 = pneg %p79
      %p86 = scmp.eq.s32.totalorder %s32, 3
      %p87 = por %p85, %p86
      %p88 = scmp.ne.s32.totalorder %s80, %s83
      %p89 = scmp.eq.s32.totalorder %s32, 0
      %p90 = por %p88, %p89
      %p91 = scmp.ne.s32.totalorder %s80, %s83
      %p92 = scmp.eq.s32.totalorder %s37, 3
      %p93 = por %p91, %p92
      %p94 = scmp.ne.s32.totalorder %s83, %s84
      %p95 = scmp.eq.s32.totalorder %s37, 0
      %p96 = por %p94, %p95
      %p97 = scmp.ne.s32.totalorder %s83, %s84
      %p98 = scmp.eq.s32.totalorder %s38, 3
      %p99 = por %p97, %p98
      %p101 = scmp.ne.s32.totalorder %s84, %s100
      %p102 = scmp.eq.s32.totalorder %s38, 0
      %p103 = por %p101, %p102
      %s104 = ssub.s32 %s40, %s47
      %p105 = scmp.eq.s32.totalorder %s104, 0
      %s107 = sadd.s32 %s106, 1
      %s108 = scalar_select %p105, %s106, %s107
      %p111 = pneg %p105
      %p112 = scmp.eq.s32.totalorder %s32, 3
      %p113 = por %p111, %p112
      %p114 = scmp.ne.s32.totalorder %s106, %s109
      %p115 = scmp.eq.s32.totalorder %s32, 0
      %p116 = por %p114, %p115
      %p117 = scmp.ne.s32.totalorder %s106, %s109
      %p118 = scmp.eq.s32.totalorder %s37, 3
      %p119 = por %p117, %p118
      %p120 = scmp.ne.s32.totalorder %s109, %s110
      %p121 = scmp.eq.s32.totalorder %s37, 0
      %p122 = por %p120, %p121
      %p123 = scmp.ne.s32.totalorder %s109, %s110
      %p124 = scmp.eq.s32.totalorder %s38, 3
      %p125 = por %p123, %p124
      %p127 = scmp.ne.s32.totalorder %s110, %s126
      %p128 = scmp.eq.s32.totalorder %s38, 0
      %p129 = por %p127, %p128
      %s130 = ssub.s32 %s40, %s47
      %p131 = scmp.eq.s32.totalorder %s130, 0
      %s133 = sadd.s32 %s132, 1
      %s134 = scalar_select %p131, %s132, %s133
      %p137 = pneg %p131
      %p138 = scmp.eq.s32.totalorder %s32, 3
      %p139 = por %p137, %p138
      %p140 = scmp.ne.s32.totalorder %s132, %s135
      %p141 = scmp.eq.s32.totalorder %s32, 0
      %p142 = por %p140, %p141
      %p143 = scmp.ne.s32.totalorder %s132, %s135
      %p144 = scmp.eq.s32.totalorder %s37, 3
      %p145 = por %p143, %p144
      %p146 = scmp.ne.s32.totalorder %s135, %s136
      %p147 = scmp.eq.s32.totalorder %s37, 0
      %p148 = por %p146, %p147
      %p149 = scmp.ne.s32.totalorder %s135, %s136
      %p150 = scmp.eq.s32.totalorder %s38, 3
      %p151 = por %p149, %p150
      %p153 = scmp.ne.s32.totalorder %s136, %s152
      %p154 = scmp.eq.s32.totalorder %s38, 0
      %p155 = por %p153, %p154
      %s156 = ssub.s32 %s40, %s47
      %p157 = scmp.eq.s32.totalorder %s156, 0
      %s159 = sadd.s32 %s158, 1
      %s160 = scalar_select %p157, %s158, %s159
      %p163 = pneg %p157
      %p164 = scmp.eq.s32.totalorder %s32, 3
      %p165 = por %p163, %p164
      %p166 = scmp.ne.s32.totalorder %s158, %s161
      %p167 = scmp.eq.s32.totalorder %s32, 0
      %p168 = por %p166, %p167
      %p169 = scmp.ne.s32.totalorder %s158, %s161
      %p170 = scmp.eq.s32.totalorder %s37, 3
      %p171 = por %p169, %p170
      %p172 = scmp.ne.s32.totalorder %s161, %s162
      %p173 = scmp.eq.s32.totalorder %s37, 0
      %p174 = por %p172, %p173
      %p175 = scmp.ne.s32.totalorder %s161, %s162
      %p176 = scmp.eq.s32.totalorder %s38, 3
      %p177 = por %p175, %p176
      %p179 = scmp.ne.s32.totalorder %s162, %s178
      %p180 = scmp.eq.s32.totalorder %s38, 0
      %p181 = por %p179, %p180
      %s182 = ssub.s32 %s40, %s47
      %p183 = scmp.eq.s32.totalorder %s182, 0
      %s185 = sadd.s32 %s184, 1
      %s186 = scalar_select %p183, %s184, %s185
      %p189 = pneg %p183
      %p190 = scmp.eq.s32.totalorder %s32, 3
      %p191 = por %p189, %p190
      %p192 = scmp.ne.s32.totalorder %s184, %s187
      %p193 = scmp.eq.s32.totalorder %s32, 0
      %p194 = por %p192, %p193
      %p195 = scmp.ne.s32.totalorder %s184, %s187
      %p196 = scmp.eq.s32.totalorder %s37, 3
      %p197 = por %p195, %p196
      %p198 = scmp.ne.s32.totalorder %s187, %s188
      %p199 = scmp.eq.s32.totalorder %s37, 0
      %p200 = por %p198, %p199
      %p201 = scmp.ne.s32.totalorder %s187, %s188
      %p202 = scmp.eq.s32.totalorder %s38, 3
      %p203 = por %p201, %p202
      %p205 = scmp.ne.s32.totalorder %s188, %s204
      %p206 = scmp.eq.s32.totalorder %s38, 0
      %p207 = por %p205, %p206
      %s208 = ssub.s32 %s40, %s47
      %p209 = scmp.eq.s32.totalorder %s208, 0
      %s211 = sadd.s32 %s210, 1
      %s212 = scalar_select %p209, %s210, %s211
      %p215 = pneg %p209
      %p216 = scmp.eq.s32.totalorder %s32, 3
      %p217 = por %p215, %p216
      %p218 = scmp.ne.s32.totalorder %s210, %s213
      %p219 = scmp.eq.s32.totalorder %s32, 0
      %p220 = por %p218, %p219
      %p221 = scmp.ne.s32.totalorder %s210, %s213
      %p222 = scmp.eq.s32.totalorder %s37, 3
      %p223 = por %p221, %p222
      %p224 = scmp.ne.s32.totalorder %s213, %s214
      %p225 = scmp.eq.s32.totalorder %s37, 0
      %p226 = por %p224, %p225
      %p227 = scmp.ne.s32.totalorder %s213, %s214
      %p228 = scmp.eq.s32.totalorder %s38, 3
      %p229 = por %p227, %p228
      %p231 = scmp.ne.s32.totalorder %s214, %s230
      %p232 = scmp.eq.s32.totalorder %s38, 0
      %p233 = por %p231, %p232
      %s234 = ssub.s32 %s40, %s47
      %p235 = scmp.eq.s32.totalorder %s234, 0
      %s237 = sadd.s32 %s236, 1
      %s238 = scalar_select %p235, %s236, %s237
      %p241 = pneg %p235
      %p242 = scmp.eq.s32.totalorder %s32, 3
      %p243 = por %p241, %p242
      %p244 = scmp.ne.s32.totalorder %s236, %s239
      %p245 = scmp.eq.s32.totalorder %s32, 0
      %p246 = por %p244, %p245
      %p247 = scmp.ne.s32.totalorder %s236, %s239
      %p248 = scmp.eq.s32.totalorder %s37, 3
      %p249 = por %p247, %p248
      %p250 = scmp.ne.s32.totalorder %s239, %s240
      %p251 = scmp.eq.s32.totalorder %s37, 0
      %p252 = por %p250, %p251
      %p253 = scmp.ne.s32.totalorder %s239, %s240
      %p254 = scmp.eq.s32.totalorder %s38, 3
      %p255 = por %p253, %p254
      %p257 = scmp.ne.s32.totalorder %s240, %s256
      %p258 = scmp.eq.s32.totalorder %s38, 0
      %p259 = por %p257, %p258
      %s260 = ssub.s32 %s40, %s47
      %p261 = scmp.eq.s32.totalorder %s260, 0
      %s263 = sadd.s32 %s262, 1
      %s264 = scalar_select %p261, %s262, %s263
      %p267 = pneg %p261
      %p268 = scmp.eq.s32.totalorder %s32, 3
      %p269 = por %p267, %p268
      %p270 = scmp.ne.s32.totalorder %s262, %s265
      %p271 = scmp.eq.s32.totalorder %s32, 0
      %p272 = por %p270, %p271
      %p273 = scmp.ne.s32.totalorder %s262, %s265
      %p274 = scmp.eq.s32.totalorder %s37, 3
      %p275 = por %p273, %p274
      %p276 = scmp.ne.s32.totalorder %s265, %s266
      %p277 = scmp.eq.s32.totalorder %s37, 0
      %p278 = por %p276, %p277
      %p279 = scmp.ne.s32.totalorder %s265, %s266
      %p280 = scmp.eq.s32.totalorder %s38, 3
      %p281 = por %p279, %p280
      %p283 = scmp.ne.s32.totalorder %s266, %s282
      %p284 = scmp.eq.s32.totalorder %s38, 0
      %p285 = por %p283, %p284
      %s286 = ssub.s32 %s40, %s47
      %p287 = scmp.eq.s32.totalorder %s286, 0
      %s289 = sadd.s32 %s288, 1
      %s290 = scalar_select %p287, %s288, %s289
      %p293 = pneg %p287
      %p294 = scmp.eq.s32.totalorder %s32, 3
      %p295 = por %p293, %p294
      %p296 = scmp.ne.s32.totalorder %s288, %s291
      %p297 = scmp.eq.s32.totalorder %s32, 0
      %p298 = por %p296, %p297
      %p299 = scmp.ne.s32.totalorder %s288, %s291
      %p300 = scmp.eq.s32.totalorder %s37, 3
      %p301 = por %p299, %p300
      %p302 = scmp.ne.s32.totalorder %s291, %s292
      %p303 = scmp.eq.s32.totalorder %s37, 0
      %p304 = por %p302, %p303
      %p305 = scmp.ne.s32.totalorder %s291, %s292
      %p306 = scmp.eq.s32.totalorder %s38, 3
      %p307 = por %p305, %p306
      %p309 = scmp.ne.s32.totalorder %s292, %s308
      %p310 = scmp.eq.s32.totalorder %s38, 0
      %p311 = por %p309, %p310
      %s312 = ssub.s32 %s40, %s47
      %p313 = scmp.eq.s32.totalorder %s312, 0
      %s315 = sadd.s32 %s314, 1
      %s316 = scalar_select %p313, %s314, %s315
      %p319 = pneg %p313
      %p320 = scmp.eq.s32.totalorder %s32, 3
      %p321 = por %p319, %p320
      %p322 = scmp.ne.s32.totalorder %s314, %s317
      %p323 = scmp.eq.s32.totalorder %s32, 0
      %p324 = por %p322, %p323
      %p325 = scmp.ne.s32.totalorder %s314, %s317
      %p326 = scmp.eq.s32.totalorder %s37, 3
      %p327 = por %p325, %p326
      %p328 = scmp.ne.s32.totalorder %s317, %s318
      %p329 = scmp.eq.s32.totalorder %s37, 0
      %p330 = por %p328, %p329
      %p331 = scmp.ne.s32.totalorder %s317, %s318
      %p332 = scmp.eq.s32.totalorder %s38, 3
      %p333 = por %p331, %p332
      %p335 = scmp.ne.s32.totalorder %s318, %s334
      %p336 = scmp.eq.s32.totalorder %s38, 0
      %p337 = por %p335, %p336
      %s338 = ssub.s32 %s39, %s51
      %p339 = scmp.eq.s32.totalorder %s338, 0
      %s341 = sadd.s32 %s340, 1
      %s342 = scalar_select %p339, %s340, %s341
      %p345 = pneg %p339
      %p346 = scmp.eq.s32.totalorder %s32, 3
      %p347 = por %p345, %p346
      %p348 = scmp.ne.s32.totalorder %s340, %s343
      %p349 = scmp.eq.s32.totalorder %s32, 0
      %p350 = por %p348, %p349
      %p351 = scmp.ne.s32.totalorder %s340, %s343
      %p352 = scmp.eq.s32.totalorder %s37, 3
      %p353 = por %p351, %p352
      %p354 = scmp.ne.s32.totalorder %s343, %s344
      %p355 = scmp.eq.s32.totalorder %s37, 0
      %p356 = por %p354, %p355
      %p357 = scmp.ne.s32.totalorder %s343, %s344
      %p358 = scmp.eq.s32.totalorder %s38, 3
      %p359 = por %p357, %p358
      %p361 = scmp.ne.s32.totalorder %s344, %s360
      %p362 = scmp.eq.s32.totalorder %s38, 0
      %p363 = por %p361, %p362
      %p364 = scmp.le.s32.totalorder 1, %s32
      %p365 = scmp.lt.s32.totalorder %s32, 5
      %p366 = pnand %p364, %p365
      %p367 = pneg %p366
      // Predicated region
      $region9: #{tpu_custom_call.1} parent=5 // pred_check
        _
      $region10: #{tpu_custom_call.1} parent=5 // pred_check_branch
        %369 = sbr.rel (%p366) target = $region12
      $region11: #{tpu_custom_call.1} parent=5 // pred_region
        %s370 = ssub.s32 %s32, 1
      $region12: #{tpu_custom_call.1} parent=5 // pred_fallthru
        _
      %p371 = scmp.lt.s32.totalorder %s32, 4
      // Predicated region
      $region13: #{tpu_custom_call.1} parent=5 // pred_check
        %p372 = pneg %p371
      $region14: #{tpu_custom_call.1} parent=5 // pred_check_branch
        %374 = sbr.rel (%p372) target = $region16
      $region15: #{tpu_custom_call.1} parent=5 // pred_region
        // Predicated region
        $region17: #{tpu_custom_call.1} parent=15 // pred_check
          %p375 = pneg %p64
        $region18: #{tpu_custom_call.1} parent=15 // pred_check_branch
          %377 = sbr.rel (%p375) target = $region20
        $region19: #{tpu_custom_call.1} parent=15 // pred_region
          %s378 = sand.u32 %s54, 1
          %s379 = scalar_lea.sflag [#allocation3], %s378
          %s380 = sand.u32 %s54, 1
          %s381 = smul.addr %s380, 64
          %s382 = scalar_lea.vmem [#allocation2], %s381
          %s384 = ssub.s32 1024, 1024
          %385 = vsyncadd %s379, %s384
          %s386 = smul.addr %s39, 2
          %s387 = smul.addr %s386, 64
          %s388 = scalar_lea.hbm %s0, %s387
          %s389 = sshll.u32 %s382, 4
          %s390 = int_to_ptr.vmem [resolvable:$true] %s389
          %395 = dma.hbm_to_vmem [thread:$0]  %s388, 1024, %s390, %s379, 256, 128, 8
        $region20: #{tpu_custom_call.1} parent=15 // pred_fallthru
          _
        // Predicated region
        $region21: #{tpu_custom_call.1} parent=15 // pred_check
          %p396 = pneg %p90
        $region22: #{tpu_custom_call.1} parent=15 // pred_check_branch
          %398 = sbr.rel (%p396) target = $region24
        $region23: #{tpu_custom_call.1} parent=15 // pred_region
          %s399 = sand.u32 %s32, 1
          %s400 = scalar_lea.sflag [#allocation6], %s399
          %s401 = sand.u32 %s80, 1
          %s402 = smul.addr %s401, 256
          %s403 = scalar_lea.vmem [#allocation5], %s402
          %s405 = ssub.s32 4096, 4096
          %406 = vsyncadd %s400, %s405
          %s407 = smul.addr %s40, 64
          %s408 = smul.addr %s407, 64
          %s409 = scalar_lea.hbm %s1, %s408
          %s410 = sshll.u32 %s403, 4
          %s411 = int_to_ptr.vmem [resolvable:$true] %s410
          %416 = dma.hbm_to_vmem [thread:$0]  %s409, 4096, %s411, %s400, 128, 128, 8
        $region24: #{tpu_custom_call.1} parent=15 // pred_fallthru
          _
        // Predicated region
        $region25: #{tpu_custom_call.1} parent=15 // pred_check
          %p417 = pneg %p116
        $region26: #{tpu_custom_call.1} parent=15 // pred_check_branch
          %419 = sbr.rel (%p417) target = $region28
        $region27: #{tpu_custom_call.1} parent=15 // pred_region
          %s420 = sand.u32 %s32, 1
          %s421 = scalar_lea.sflag [#allocation6], %s420
          %s422 = sand.u32 %s106, 1
          %s423 = smul.addr %s422, 256
          %s424 = scalar_lea.vmem [#allocation7], %s423
          %s426 = ssub.s32 4096, 4096
          %427 = vsyncadd %s421, %s426
          %s428 = smul.addr %s40, 64
          %s429 = smul.addr %s428, 64
          %s430 = scalar_lea.hbm %s2, %s429
          %s431 = sshll.u32 %s424, 4
          %s432 = int_to_ptr.vmem [resolvable:$true] %s431
          %437 = dma.hbm_to_vmem [thread:$0]  %s430, 4096, %s432, %s421, 128, 128, 8
        $region28: #{tpu_custom_call.1} parent=15 // pred_fallthru
          _
        // Predicated region
        $region29: #{tpu_custom_call.1} parent=15 // pred_check
          %p438 = pneg %p142
        $region30: #{tpu_custom_call.1} parent=15 // pred_check_branch
          %440 = sbr.rel (%p438) target = $region32
        $region31: #{tpu_custom_call.1} parent=15 // pred_region
          %s441 = sand.u32 %s32, 1
          %s442 = scalar_lea.sflag [#allocation9], %s441
          %s443 = sand.u32 %s132, 1
          %s444 = smul.addr %s443, 256
          %s445 = scalar_lea.vmem [#allocation8], %s444
          %s447 = ssub.s32 4096, 4096
          %448 = vsyncadd %s442, %s447
          %s449 = smul.addr %s40, 64
          %s450 = smul.addr %s449, 64
          %s451 = scalar_lea.hbm %s3, %s450
          %s452 = sshll.u32 %s445, 4
          %s453 = int_to_ptr.vmem [resolvable:$true] %s452
          %458 = dma.hbm_to_vmem [thread:$0]  %s451, 4096, %s453, %s442, 128, 128, 8
        $region32: #{tpu_custom_call.1} parent=15 // pred_fallthru
          _
        // Predicated region
        $region33: #{tpu_custom_call.1} parent=15 // pred_check
          %p459 = pneg %p168
        $region34: #{tpu_custom_call.1} parent=15 // pred_check_branch
          %461 = sbr.rel (%p459) target = $region36
        $region35: #{tpu_custom_call.1} parent=15 // pred_region
          %p462 = scmp.lt.s32.totalorder %s40, 1
          %s463 = scalar_select %p462, %s40, 1
          %s464 = smul.addr %s463, 2
          %s465 = scalar_lea.vmem %s4, %s464
        $region36: #{tpu_custom_call.1} parent=15 // pred_fallthru
          _
        // Predicated region
        $region37: #{tpu_custom_call.1} parent=15 // pred_check
          %p466 = pneg %p194
        $region38: #{tpu_custom_call.1} parent=15 // pred_check_branch
          %468 = sbr.rel (%p466) target = $region40
        $region39: #{tpu_custom_call.1} parent=15 // pred_region
          %p469 = scmp.lt.s32.totalorder %s40, 1
          %s470 = scalar_select %p469, %s40, 1
          %s471 = smul.addr %s470, 2
          %s472 = scalar_lea.vmem %s5, %s471
        $region40: #{tpu_custom_call.1} parent=15 // pred_fallthru
          _
        // Predicated region
        $region41: #{tpu_custom_call.1} parent=15 // pred_check
          %p473 = pneg %p220
        $region42: #{tpu_custom_call.1} parent=15 // pred_check_branch
          %475 = sbr.rel (%p473) target = $region44
        $region43: #{tpu_custom_call.1} parent=15 // pred_region
          %s476 = sand.u32 %s32, 1
          %s477 = scalar_lea.sflag [#allocation9], %s476
          %s478 = sand.u32 %s210, 1
          %s479 = smul.addr %s478, 2
          %s480 = scalar_lea.vmem [#allocation10], %s479
          %s482 = ssub.s32 32, 32
          %483 = vsyncadd %s477, %s482
          %s484 = smul.addr %s40, 2
          %s485 = smul.addr %s484, 16
          %s486 = scalar_lea.hbm %s6, %s485
          %s488 = sshll.u32 %s480, 4
          %s489 = int_to_ptr.vmem [resolvable:$true] %s488
          %491 = dma.hbm_to_vmem [thread:$0]  %s486, 32, %s489, %s477
        $region44: #{tpu_custom_call.1} parent=15 // pred_fallthru
          _
        // Predicated region
        $region45: #{tpu_custom_call.1} parent=15 // pred_check
          %p492 = pneg %p246
        $region46: #{tpu_custom_call.1} parent=15 // pred_check_branch
          %494 = sbr.rel (%p492) target = $region48
        $region47: #{tpu_custom_call.1} parent=15 // pred_region
          %s495 = sand.u32 %s32, 1
          %s496 = scalar_lea.sflag [#allocation12], %s495
          %s497 = sand.u32 %s236, 1
          %s498 = smul.addr %s497, 128
          %s499 = scalar_lea.vmem [#allocation11], %s498
          %s501 = ssub.s32 2048, 2048
          %502 = vsyncadd %s496, %s501
          %s503 = smul.addr %s40, 32
          %s504 = smul.addr %s503, 64
          %s505 = scalar_lea.hbm %s7, %s504
          %s506 = sshll.u32 %s499, 4
          %s507 = int_to_ptr.vmem [resolvable:$true] %s506
          %512 = dma.hbm_to_vmem [thread:$0]  %s505, 2048, %s507, %s496, 64, 64, 4
        $region48: #{tpu_custom_call.1} parent=15 // pred_fallthru
          _
        // Predicated region
        $region49: #{tpu_custom_call.1} parent=15 // pred_check
          %p513 = pneg %p272
        $region50: #{tpu_custom_call.1} parent=15 // pred_check_branch
          %515 = sbr.rel (%p513) target = $region52
        $region51: #{tpu_custom_call.1} parent=15 // pred_region
          %p516 = scmp.lt.s32.totalorder %s40, 1
          %s517 = scalar_select %p516, %s40, 1
          %s518 = scalar_lea.vmem %s8, %s517
        $region52: #{tpu_custom_call.1} parent=15 // pred_fallthru
          _
        // Predicated region
        $region53: #{tpu_custom_call.1} parent=15 // pred_check
          %p519 = pneg %p298
        $region54: #{tpu_custom_call.1} parent=15 // pred_check_branch
          %521 = sbr.rel (%p519) target = $region56
        $region55: #{tpu_custom_call.1} parent=15 // pred_region
          %s522 = sand.u32 %s32, 1
          %s523 = scalar_lea.sflag [#allocation12], %s522
          %s524 = sand.u32 %s288, 1
          %s525 = smul.addr %s524, 128
          %s526 = scalar_lea.vmem [#allocation13], %s525
          %s528 = ssub.s32 2048, 2048
          %529 = vsyncadd %s523, %s528
          %s530 = smul.addr %s40, 32
          %s531 = smul.addr %s530, 64
          %s532 = scalar_lea.hbm %s9, %s531
          %s533 = sshll.u32 %s526, 4
          %s534 = int_to_ptr.vmem [resolvable:$true] %s533
          %539 = dma.hbm_to_vmem [thread:$0]  %s532, 2048, %s534, %s523, 128, 128, 8
        $region56: #{tpu_custom_call.1} parent=15 // pred_fallthru
          _
        // Predicated region
        $region57: #{tpu_custom_call.1} parent=15 // pred_check
          %p540 = pneg %p324
        $region58: #{tpu_custom_call.1} parent=15 // pred_check_branch
          %542 = sbr.rel (%p540) target = $region60
        $region59: #{tpu_custom_call.1} parent=15 // pred_region
          %p543 = scmp.lt.s32.totalorder %s40, 1
          %s544 = scalar_select %p543, %s40, 1
          %s545 = smul.addr %s544, 2
          %s546 = scalar_lea.vmem %s10, %s545
        $region60: #{tpu_custom_call.1} parent=15 // pred_fallthru
          _
      $region16: #{tpu_custom_call.1} parent=5 // pred_fallthru
        _
      %p547 = scmp.le.s32.totalorder 1, %s32
      %p548 = scmp.lt.s32.totalorder %s32, 5
      %p549 = pnand %p547, %p548
      %p550 = pneg %p549
      // Predicated region
      $region61: #{tpu_custom_call.1} parent=5 // pred_check
        _
      $region62: #{tpu_custom_call.1} parent=5 // pred_check_branch
        %552 = sbr.rel (%p549) target = $region64
      $region63: #{tpu_custom_call.1} parent=5 // pred_region
        %s553 = ssub.s32 %s32, 1
        %s554 = sand.u32 %s57, 1
        %s555 = scalar_lea.sflag [#allocation3], %s554
        %s556 = sand.u32 %s57, 1
        %s557 = smul.addr %s556, 64
        %s558 = scalar_lea.vmem [#allocation2], %s557
        // Predicated region
        $region65: #{tpu_custom_call.1} parent=63 // pred_check
          %p559 = pneg %p70
        $region66: #{tpu_custom_call.1} parent=63 // pred_check_branch
          %561 = sbr.rel (%p559) target = $region68
        $region67: #{tpu_custom_call.1} parent=63 // pred_region
          %562 = dma.done %s555, 1024
        $region68: #{tpu_custom_call.1} parent=63 // pred_fallthru
          _
        %s563 = sand.u32 %s37, 1
        %s564 = scalar_lea.sflag [#allocation6], %s563
        %s565 = sand.u32 %s83, 1
        %s566 = smul.addr %s565, 256
        %s567 = scalar_lea.vmem [#allocation5], %s566
        // Predicated region
        $region69: #{tpu_custom_call.1} parent=63 // pred_check
          %p568 = pneg %p96
        $region70: #{tpu_custom_call.1} parent=63 // pred_check_branch
          %570 = sbr.rel (%p568) target = $region72
        $region71: #{tpu_custom_call.1} parent=63 // pred_region
          %571 = dma.done %s564, 4096
        $region72: #{tpu_custom_call.1} parent=63 // pred_fallthru
          _
        %s572 = sand.u32 %s37, 1
        %s573 = scalar_lea.sflag [#allocation6], %s572
        %s574 = sand.u32 %s109, 1
        %s575 = smul.addr %s574, 256
        %s576 = scalar_lea.vmem [#allocation7], %s575
        // Predicated region
        $region73: #{tpu_custom_call.1} parent=63 // pred_check
          %p577 = pneg %p122
        $region74: #{tpu_custom_call.1} parent=63 // pred_check_branch
          %579 = sbr.rel (%p577) target = $region76
        $region75: #{tpu_custom_call.1} parent=63 // pred_region
          %580 = dma.done %s573, 4096
        $region76: #{tpu_custom_call.1} parent=63 // pred_fallthru
          _
        %s581 = sand.u32 %s37, 1
        %s582 = scalar_lea.sflag [#allocation9], %s581
        %s583 = sand.u32 %s135, 1
        %s584 = smul.addr %s583, 256
        %s585 = scalar_lea.vmem [#allocation8], %s584
        // Predicated region
        $region77: #{tpu_custom_call.1} parent=63 // pred_check
          %p586 = pneg %p148
        $region78: #{tpu_custom_call.1} parent=63 // pred_check_branch
          %588 = sbr.rel (%p586) target = $region80
        $region79: #{tpu_custom_call.1} parent=63 // pred_region
          %589 = dma.done %s582, 4096
        $region80: #{tpu_custom_call.1} parent=63 // pred_fallthru
          _
        %s590 = sand.u32 %s37, 1
        %s591 = scalar_lea.sflag [#allocation9], %s590
        %s592 = sand.u32 %s213, 1
        %s593 = smul.addr %s592, 2
        %s594 = scalar_lea.vmem [#allocation10], %s593
        // Predicated region
        $region81: #{tpu_custom_call.1} parent=63 // pred_check
          %p595 = pneg %p226
        $region82: #{tpu_custom_call.1} parent=63 // pred_check_branch
          %597 = sbr.rel (%p595) target = $region84
        $region83: #{tpu_custom_call.1} parent=63 // pred_region
          %598 = dma.done %s591, 32
        $region84: #{tpu_custom_call.1} parent=63 // pred_fallthru
          _
        %s599 = sand.u32 %s37, 1
        %s600 = scalar_lea.sflag [#allocation12], %s599
        %s601 = sand.u32 %s239, 1
        %s602 = smul.addr %s601, 128
        %s603 = scalar_lea.vmem [#allocation11], %s602
        // Predicated region
        $region85: #{tpu_custom_call.1} parent=63 // pred_check
          %p604 = pneg %p252
        $region86: #{tpu_custom_call.1} parent=63 // pred_check_branch
          %606 = sbr.rel (%p604) target = $region88
        $region87: #{tpu_custom_call.1} parent=63 // pred_region
          %607 = dma.done %s600, 2048
        $region88: #{tpu_custom_call.1} parent=63 // pred_fallthru
          _
        %s608 = sand.u32 %s37, 1
        %s609 = scalar_lea.sflag [#allocation12], %s608
        %s610 = sand.u32 %s291, 1
        %s611 = smul.addr %s610, 128
        %s612 = scalar_lea.vmem [#allocation13], %s611
        // Predicated region
        $region89: #{tpu_custom_call.1} parent=63 // pred_check
          %p613 = pneg %p304
        $region90: #{tpu_custom_call.1} parent=63 // pred_check_branch
          %615 = sbr.rel (%p613) target = $region92
        $region91: #{tpu_custom_call.1} parent=63 // pred_region
          %616 = dma.done %s609, 2048
        $region92: #{tpu_custom_call.1} parent=63 // pred_fallthru
          _
        %s617 = sand.u32 %s57, 1
        %s618 = scalar_lea.sflag [#allocation3], %s617
        %s619 = sand.u32 %s57, 1
        %s620 = smul.addr %s619, 64
        %s621 = scalar_lea.vmem [#allocation2], %s620
        %p622 = pneg %p70
        %p623 = pneg %p67
        %s624 = sand.u32 %s37, 1
        %s625 = scalar_lea.sflag [#allocation6], %s624
        %s626 = sand.u32 %s83, 1
        %s627 = smul.addr %s626, 256
        %s628 = scalar_lea.vmem [#allocation5], %s627
        %p629 = pneg %p96
        %p630 = pneg %p93
        %s631 = sand.u32 %s37, 1
        %s632 = scalar_lea.sflag [#allocation6], %s631
        %s633 = sand.u32 %s109, 1
        %s634 = smul.addr %s633, 256
        %s635 = scalar_lea.vmem [#allocation7], %s634
        %p636 = pneg %p122
        %p637 = pneg %p119
        %s638 = sand.u32 %s37, 1
        %s639 = scalar_lea.sflag [#allocation9], %s638
        %s640 = sand.u32 %s135, 1
        %s641 = smul.addr %s640, 256
        %s642 = scalar_lea.vmem [#allocation8], %s641
        %p643 = pneg %p148
        %p644 = pneg %p145
        %p645 = scmp.lt.s32.totalorder %s42, 1
        %s646 = scalar_select %p645, %s42, 1
        %s647 = smul.addr %s646, 2
        %s648 = scalar_lea.vmem %s4, %s647
        %p649 = pneg %p174
        %p650 = pneg %p171
        %p651 = scmp.lt.s32.totalorder %s42, 1
        %s652 = scalar_select %p651, %s42, 1
        %s653 = smul.addr %s652, 2
        %s654 = scalar_lea.vmem %s5, %s653
        %p655 = pneg %p200
        %p656 = pneg %p197
        %s657 = sand.u32 %s37, 1
        %s658 = scalar_lea.sflag [#allocation9], %s657
        %s659 = sand.u32 %s213, 1
        %s660 = smul.addr %s659, 2
        %s661 = scalar_lea.vmem [#allocation10], %s660
        %p662 = pneg %p226
        %p663 = pneg %p223
        %s664 = sand.u32 %s37, 1
        %s665 = scalar_lea.sflag [#allocation12], %s664
        %s666 = sand.u32 %s239, 1
        %s667 = smul.addr %s666, 128
        %s668 = scalar_lea.vmem [#allocation11], %s667
        %p669 = pneg %p252
        %p670 = pneg %p249
        %p671 = scmp.lt.s32.totalorder %s42, 1
        %s672 = scalar_select %p671, %s42, 1
        %s673 = scalar_lea.vmem %s8, %s672
        %p674 = pneg %p278
        %p675 = pneg %p275
        %s676 = sand.u32 %s37, 1
        %s677 = scalar_lea.sflag [#allocation12], %s676
        %s678 = sand.u32 %s291, 1
        %s679 = smul.addr %s678, 128
        %s680 = scalar_lea.vmem [#allocation13], %s679
        %p681 = pneg %p304
        %p682 = pneg %p301
        %p683 = scmp.lt.s32.totalorder %s42, 1
        %s684 = scalar_select %p683, %s42, 1
        %s685 = smul.addr %s684, 2
        %s686 = scalar_lea.vmem %s10, %s685
        %p687 = pneg %p330
        %p688 = pneg %p327
        %p689 = pneg %p356
        %p690 = pneg %p353
        %s691 = sand.u32 %s343, 1
        %s692 = scalar_lea.sflag [#allocation4], %s691
        %s693 = sand.u32 %s343, 1
        %s694 = smul.addr %s693, 16
        %s695 = scalar_lea.vmem [#allocation14], %s694
        %p696 = scmp.lt.s32.totalorder %s42, 1
        %s697 = scalar_select %p696, %s42, 1
        %s698 = smul.addr %s697, 2
        %s699 = scalar_lea.vmem %s4, %s698
        %p700 = scmp.lt.s32.totalorder %s42, 1
        %s701 = scalar_select %p700, %s42, 1
        %s702 = smul.addr %s701, 2
        %s703 = scalar_lea.vmem %s5, %s702
        %p704 = scmp.lt.s32.totalorder %s42, 1
        %s705 = scalar_select %p704, %s42, 1
        %s706 = scalar_lea.vmem %s8, %s705
        %p707 = scmp.lt.s32.totalorder %s42, 1
        %s708 = scalar_select %p707, %s42, 1
        %s709 = smul.addr %s708, 2
        %s710 = scalar_lea.vmem %s10, %s709
        %v712 = vld [vmem:[%s558] sm:$0xff]
        %v713 = vld [vmem:[%s558 + $0x8] sm:$0xff]
        %v714 = vld [vmem:[%s558 + $0x10] sm:$0xff]
        %v715 = vld [vmem:[%s558 + $0x18] sm:$0xff]
        %v716 = vld [vmem:[%s558 + $0x20] sm:$0xff]
        %v717 = vld [vmem:[%s558 + $0x28] sm:$0xff]
        %v718 = vld [vmem:[%s558 + $0x30] sm:$0xff]
        %v719 = vld [vmem:[%s558 + $0x38] sm:$0xff]
        %v720 = vld [vmem:[%s567] sm:$0xff]
        %v721 = vld [vmem:[%s567 + $0x8] sm:$0xff]
        %v722 = vld [vmem:[%s567 + $0x10] sm:$0xff]
        %v723 = vld [vmem:[%s567 + $0x18] sm:$0xff]
        %v724 = vld [vmem:[%s567 + $0x20] sm:$0xff]
        %v725 = vld [vmem:[%s567 + $0x28] sm:$0xff]
        %v726 = vld [vmem:[%s567 + $0x30] sm:$0xff]
        %v727 = vld [vmem:[%s567 + $0x38] sm:$0xff]
        %v728 = vld [vmem:[%s567 + $0x40] sm:$0xff]
        %v729 = vld [vmem:[%s567 + $0x48] sm:$0xff]
        %v730 = vld [vmem:[%s567 + $0x50] sm:$0xff]
        %v731 = vld [vmem:[%s567 + $0x58] sm:$0xff]
        %v732 = vld [vmem:[%s567 + $0x60] sm:$0xff]
        %v733 = vld [vmem:[%s567 + $0x68] sm:$0xff]
        %v734 = vld [vmem:[%s567 + $0x70] sm:$0xff]
        %v735 = vld [vmem:[%s567 + $0x78] sm:$0xff]
        %v736 = vld [vmem:[%s567 + $0x80] sm:$0xff]
        %v737 = vld [vmem:[%s567 + $0x88] sm:$0xff]
        %v738 = vld [vmem:[%s567 + $0x90] sm:$0xff]
        %v739 = vld [vmem:[%s567 + $0x98] sm:$0xff]
        %v740 = vld [vmem:[%s567 + $0xa0] sm:$0xff]
        %v741 = vld [vmem:[%s567 + $0xa8] sm:$0xff]
        %v742 = vld [vmem:[%s567 + $0xb0] sm:$0xff]
        %v743 = vld [vmem:[%s567 + $0xb8] sm:$0xff]
        %v744 = vld [vmem:[%s567 + $0xc0] sm:$0xff]
        %v745 = vld [vmem:[%s567 + $0xc8] sm:$0xff]
        %v746 = vld [vmem:[%s567 + $0xd0] sm:$0xff]
        %v747 = vld [vmem:[%s567 + $0xd8] sm:$0xff]
        %v748 = vld [vmem:[%s567 + $0xe0] sm:$0xff]
        %v749 = vld [vmem:[%s567 + $0xe8] sm:$0xff]
        %v750 = vld [vmem:[%s567 + $0xf0] sm:$0xff]
        %v751 = vld [vmem:[%s567 + $0xf8] sm:$0xff]
        %v760 = vunpack.c.l.b16 %v712
        %v761 = vunpack.c.h.b16 %v712
        %v762 = vunpack.c.l.b16 %v713
        %v763 = vunpack.c.h.b16 %v713
        %v764 = vunpack.c.l.b16 %v714
        %v765 = vunpack.c.h.b16 %v714
        %v766 = vunpack.c.l.b16 %v715
        %v767 = vunpack.c.h.b16 %v715
        %v768 = vunpack.c.l.b16 %v716
        %v769 = vunpack.c.h.b16 %v716
        %v770 = vunpack.c.l.b16 %v717
        %v771 = vunpack.c.h.b16 %v717
        %v772 = vunpack.c.l.b16 %v718
        %v773 = vunpack.c.h.b16 %v718
        %v774 = vunpack.c.l.b16 %v719
        %v775 = vunpack.c.h.b16 %v719
        %v776 = vpack.c.b16 %v762, %v760
        %v777 = vpack.c.b16 %v763, %v761
        %v778 = vpack.c.b16 %v766, %v764
        %v779 = vpack.c.b16 %v767, %v765
        %v780 = vpack.c.b16 %v770, %v768
        %v781 = vpack.c.b16 %v771, %v769
        %v782 = vpack.c.b16 %v774, %v772
        %v783 = vpack.c.b16 %v775, %v773
        %v824 = vunpack.c.l.b16 %v720
        %v825 = vunpack.c.h.b16 %v720
        %v826 = vunpack.c.l.b16 %v721
        %v827 = vunpack.c.h.b16 %v721
        %v828 = vunpack.c.l.b16 %v722
        %v829 = vunpack.c.h.b16 %v722
        %v830 = vunpack.c.l.b16 %v723
        %v831 = vunpack.c.h.b16 %v723
        %v832 = vunpack.c.l.b16 %v724
        %v833 = vunpack.c.h.b16 %v724
        %v834 = vunpack.c.l.b16 %v725
        %v835 = vunpack.c.h.b16 %v725
        %v836 = vunpack.c.l.b16 %v726
        %v837 = vunpack.c.h.b16 %v726
        %v838 = vunpack.c.l.b16 %v727
        %v839 = vunpack.c.h.b16 %v727
        %v840 = vunpack.c.l.b16 %v728
        %v841 = vunpack.c.h.b16 %v728
        %v842 = vunpack.c.l.b16 %v729
        %v843 = vunpack.c.h.b16 %v729
        %v844 = vunpack.c.l.b16 %v730
        %v845 = vunpack.c.h.b16 %v730
        %v846 = vunpack.c.l.b16 %v731
        %v847 = vunpack.c.h.b16 %v731
        %v848 = vunpack.c.l.b16 %v732
        %v849 = vunpack.c.h.b16 %v732
        %v850 = vunpack.c.l.b16 %v733
        %v851 = vunpack.c.h.b16 %v733
        %v852 = vunpack.c.l.b16 %v734
        %v853 = vunpack.c.h.b16 %v734
        %v854 = vunpack.c.l.b16 %v735
        %v855 = vunpack.c.h.b16 %v735
        %v856 = vunpack.c.l.b16 %v736
        %v857 = vunpack.c.h.b16 %v736
        %v858 = vunpack.c.l.b16 %v737
        %v859 = vunpack.c.h.b16 %v737
        %v860 = vunpack.c.l.b16 %v738
        %v861 = vunpack.c.h.b16 %v738
        %v862 = vunpack.c.l.b16 %v739
        %v863 = vunpack.c.h.b16 %v739
        %v864 = vunpack.c.l.b16 %v740
        %v865 = vunpack.c.h.b16 %v740
        %v866 = vunpack.c.l.b16 %v741
        %v867 = vunpack.c.h.b16 %v741
        %v868 = vunpack.c.l.b16 %v742
        %v869 = vunpack.c.h.b16 %v742
        %v870 = vunpack.c.l.b16 %v743
        %v871 = vunpack.c.h.b16 %v743
        %v872 = vunpack.c.l.b16 %v744
        %v873 = vunpack.c.h.b16 %v744
        %v874 = vunpack.c.l.b16 %v745
        %v875 = vunpack.c.h.b16 %v745
        %v876 = vunpack.c.l.b16 %v746
        %v877 = vunpack.c.h.b16 %v746
        %v878 = vunpack.c.l.b16 %v747
        %v879 = vunpack.c.h.b16 %v747
        %v880 = vunpack.c.l.b16 %v748
        %v881 = vunpack.c.h.b16 %v748
        %v882 = vunpack.c.l.b16 %v749
        %v883 = vunpack.c.h.b16 %v749
        %v884 = vunpack.c.l.b16 %v750
        %v885 = vunpack.c.h.b16 %v750
        %v886 = vunpack.c.l.b16 %v751
        %v887 = vunpack.c.h.b16 %v751
        %v888 = vpack.c.b16 %v826, %v824
        %v889 = vpack.c.b16 %v827, %v825
        %v890 = vpack.c.b16 %v830, %v828
        %v891 = vpack.c.b16 %v831, %v829
        %v892 = vpack.c.b16 %v834, %v832
        %v893 = vpack.c.b16 %v835, %v833
        %v894 = vpack.c.b16 %v838, %v836
        %v895 = vpack.c.b16 %v839, %v837
        %v896 = vpack.c.b16 %v842, %v840
        %v897 = vpack.c.b16 %v843, %v841
        %v898 = vpack.c.b16 %v846, %v844
        %v899 = vpack.c.b16 %v847, %v845
        %v900 = vpack.c.b16 %v850, %v848
        %v901 = vpack.c.b16 %v851, %v849
        %v902 = vpack.c.b16 %v854, %v852
        %v903 = vpack.c.b16 %v855, %v853
        %v904 = vpack.c.b16 %v858, %v856
        %v905 = vpack.c.b16 %v859, %v857
        %v906 = vpack.c.b16 %v862, %v860
        %v907 = vpack.c.b16 %v863, %v861
        %v908 = vpack.c.b16 %v866, %v864
        %v909 = vpack.c.b16 %v867, %v865
        %v910 = vpack.c.b16 %v870, %v868
        %v911 = vpack.c.b16 %v871, %v869
        %v912 = vpack.c.b16 %v874, %v872
        %v913 = vpack.c.b16 %v875, %v873
        %v914 = vpack.c.b16 %v878, %v876
        %v915 = vpack.c.b16 %v879, %v877
        %v916 = vpack.c.b16 %v882, %v880
        %v917 = vpack.c.b16 %v883, %v881
        %v918 = vpack.c.b16 %v886, %v884
        %v919 = vpack.c.b16 %v887, %v885
        %952 = vmatprep.subr.bf16.mxu0 %v903
        %953 = vmatpush1.bf16.msra.mxu0 %v902
        %954 = vmatprep.subr.bf16.mxu0 %v901
        %955 = vmatpush1.bf16.msra.mxu0 %v900
        %956 = vmatprep.subr.bf16.mxu0 %v899
        %957 = vmatpush1.bf16.msra.mxu0 %v898
        %958 = vmatprep.subr.bf16.mxu0 %v897
        %959 = vmatpush1.bf16.msra.mxu0 %v896
        %960 = vmatprep.subr.bf16.mxu0 %v895
        %961 = vmatpush1.bf16.msra.mxu0 %v894
        %962 = vmatprep.subr.bf16.mxu0 %v893
        %963 = vmatpush1.bf16.msra.mxu0 %v892
        %964 = vmatprep.subr.bf16.mxu0 %v891
        %965 = vmatpush1.bf16.msra.mxu0 %v890
        %966 = vmatprep.subr.bf16.mxu0 %v889
        %967 = vmatpush1.bf16.msra.mxu0 %v888
        %968 = vmatprep.subr.bf16.mxu0 %v919
        %969 = vmatpush2.bf16.msra.mxu0 %v918
        %970 = vmatprep.subr.bf16.mxu0 %v917
        %971 = vmatpush2.bf16.msra.mxu0 %v916
        %972 = vmatprep.subr.bf16.mxu0 %v915
        %973 = vmatpush2.bf16.msra.mxu0 %v914
        %974 = vmatprep.subr.bf16.mxu0 %v913
        %975 = vmatpush2.bf16.msra.mxu0 %v912
        %976 = vmatprep.subr.bf16.mxu0 %v911
        %977 = vmatpush2.bf16.msra.mxu0 %v910
        %978 = vmatprep.subr.bf16.mxu0 %v909
        %979 = vmatpush2.bf16.msra.mxu0 %v908
        %980 = vmatprep.subr.bf16.mxu0 %v907
        %981 = vmatpush2.bf16.msra.mxu0 %v906
        %982 = vmatprep.subr.bf16.mxu0 %v905
        %983 = vmatpush2.bf16.msra.mxu0 %v904
        %984 = vmatprep.mubr.bf16.mxu0 %v777
        %985 = vmatmul.mubr.bf16.gmra.mxu0 %v776
        %v986 = vpop.f32.mrf.mxu0
        %v987 = vadd.f32 0.0, %v986
        %v988 = vpop.f32.mrf.mxu0
        %v989 = vadd.f32 0.0, %v988
        %v990 = vpop.f32.mrf.mxu0
        %v991 = vadd.f32 0.0, %v990
        %v992 = vpop.f32.mrf.mxu0
        %v993 = vadd.f32 0.0, %v992
        %994 = vmatprep.mubr.bf16.mxu0 %v779
        %995 = vmatmul.mubr.bf16.gmra.mxu0 %v778
        %v996 = vpop.f32.mrf.mxu0
        %v997 = vadd.f32 0.0, %v996
        %v998 = vpop.f32.mrf.mxu0
        %v999 = vadd.f32 0.0, %v998
        %v1000 = vpop.f32.mrf.mxu0
        %v1001 = vadd.f32 0.0, %v1000
        %v1002 = vpop.f32.mrf.mxu0
        %v1003 = vadd.f32 0.0, %v1002
        %1004 = vmatprep.mubr.bf16.mxu0 %v781
        %1005 = vmatmul.mubr.bf16.gmra.mxu0 %v780
        %v1006 = vpop.f32.mrf.mxu0
        %v1007 = vadd.f32 0.0, %v1006
        %v1008 = vpop.f32.mrf.mxu0
        %v1009 = vadd.f32 0.0, %v1008
        %v1010 = vpop.f32.mrf.mxu0
        %v1011 = vadd.f32 0.0, %v1010
        %v1012 = vpop.f32.mrf.mxu0
        %v1013 = vadd.f32 0.0, %v1012
        %1014 = vmatprep.mubr.bf16.mxu0 %v783
        %1015 = vmatmul.mubr.bf16.gmra.mxu0 %v782
        %v1016 = vpop.f32.mrf.mxu0
        %v1017 = vadd.f32 0.0, %v1016
        %v1018 = vpop.f32.mrf.mxu0
        %v1019 = vadd.f32 0.0, %v1018
        %v1020 = vpop.f32.mrf.mxu0
        %v1021 = vadd.f32 0.0, %v1020
        %v1022 = vpop.f32.mrf.mxu0
        %v1023 = vadd.f32 0.0, %v1022
        %1024 = vdwg.mxu0
        %v1025 = vld [vmem:[%s576] sm:$0xff]
        %v1026 = vld [vmem:[%s576 + $0x8] sm:$0xff]
        %v1027 = vld [vmem:[%s576 + $0x10] sm:$0xff]
        %v1028 = vld [vmem:[%s576 + $0x18] sm:$0xff]
        %v1029 = vld [vmem:[%s576 + $0x20] sm:$0xff]
        %v1030 = vld [vmem:[%s576 + $0x28] sm:$0xff]
        %v1031 = vld [vmem:[%s576 + $0x30] sm:$0xff]
        %v1032 = vld [vmem:[%s576 + $0x38] sm:$0xff]
        %v1033 = vld [vmem:[%s576 + $0x40] sm:$0xff]
        %v1034 = vld [vmem:[%s576 + $0x48] sm:$0xff]
        %v1035 = vld [vmem:[%s576 + $0x50] sm:$0xff]
        %v1036 = vld [vmem:[%s576 + $0x58] sm:$0xff]
        %v1037 = vld [vmem:[%s576 + $0x60] sm:$0xff]
        %v1038 = vld [vmem:[%s576 + $0x68] sm:$0xff]
        %v1039 = vld [vmem:[%s576 + $0x70] sm:$0xff]
        %v1040 = vld [vmem:[%s576 + $0x78] sm:$0xff]
        %v1041 = vld [vmem:[%s576 + $0x80] sm:$0xff]
        %v1042 = vld [vmem:[%s576 + $0x88] sm:$0xff]
        %v1043 = vld [vmem:[%s576 + $0x90] sm:$0xff]
        %v1044 = vld [vmem:[%s576 + $0x98] sm:$0xff]
        %v1045 = vld [vmem:[%s576 + $0xa0] sm:$0xff]
        %v1046 = vld [vmem:[%s576 + $0xa8] sm:$0xff]
        %v1047 = vld [vmem:[%s576 + $0xb0] sm:$0xff]
        %v1048 = vld [vmem:[%s576 + $0xb8] sm:$0xff]
        %v1049 = vld [vmem:[%s576 + $0xc0] sm:$0xff]
        %v1050 = vld [vmem:[%s576 + $0xc8] sm:$0xff]
        %v1051 = vld [vmem:[%s576 + $0xd0] sm:$0xff]
        %v1052 = vld [vmem:[%s576 + $0xd8] sm:$0xff]
        %v1053 = vld [vmem:[%s576 + $0xe0] sm:$0xff]
        %v1054 = vld [vmem:[%s576 + $0xe8] sm:$0xff]
        %v1055 = vld [vmem:[%s576 + $0xf0] sm:$0xff]
        %v1056 = vld [vmem:[%s576 + $0xf8] sm:$0xff]
        %v1057 = vtanh.pop %v987
        %v1058 = vtanh.pop %v989
        %v1059 = vpack.c.bf16 %v1057, %v1057
        %v1060 = vpack.c.bf16 %v1058, %v1058
        %v1093 = vunpack.c.l.b16 %v1025
        %v1094 = vunpack.c.h.b16 %v1025
        %v1095 = vunpack.c.l.b16 %v1026
        %v1096 = vunpack.c.h.b16 %v1026
        %v1097 = vunpack.c.l.b16 %v1027
        %v1098 = vunpack.c.h.b16 %v1027
        %v1099 = vunpack.c.l.b16 %v1028
        %v1100 = vunpack.c.h.b16 %v1028
        %v1101 = vunpack.c.l.b16 %v1029
        %v1102 = vunpack.c.h.b16 %v1029
        %v1103 = vunpack.c.l.b16 %v1030
        %v1104 = vunpack.c.h.b16 %v1030
        %v1105 = vunpack.c.l.b16 %v1031
        %v1106 = vunpack.c.h.b16 %v1031
        %v1107 = vunpack.c.l.b16 %v1032
        %v1108 = vunpack.c.h.b16 %v1032
        %v1109 = vunpack.c.l.b16 %v1033
        %v1110 = vunpack.c.h.b16 %v1033
        %v1111 = vunpack.c.l.b16 %v1034
        %v1112 = vunpack.c.h.b16 %v1034
        %v1113 = vunpack.c.l.b16 %v1035
        %v1114 = vunpack.c.h.b16 %v1035
        %v1115 = vunpack.c.l.b16 %v1036
        %v1116 = vunpack.c.h.b16 %v1036
        %v1117 = vunpack.c.l.b16 %v1037
        %v1118 = vunpack.c.h.b16 %v1037
        %v1119 = vunpack.c.l.b16 %v1038
        %v1120 = vunpack.c.h.b16 %v1038
        %v1121 = vunpack.c.l.b16 %v1039
        %v1122 = vunpack.c.h.b16 %v1039
        %v1123 = vunpack.c.l.b16 %v1040
        %v1124 = vunpack.c.h.b16 %v1040
        %v1125 = vunpack.c.l.b16 %v1041
        %v1126 = vunpack.c.h.b16 %v1041
        %v1127 = vunpack.c.l.b16 %v1042
        %v1128 = vunpack.c.h.b16 %v1042
        %v1129 = vunpack.c.l.b16 %v1043
        %v1130 = vunpack.c.h.b16 %v1043
        %v1131 = vunpack.c.l.b16 %v1044
        %v1132 = vunpack.c.h.b16 %v1044
        %v1133 = vunpack.c.l.b16 %v1045
        %v1134 = vunpack.c.h.b16 %v1045
        %v1135 = vunpack.c.l.b16 %v1046
        %v1136 = vunpack.c.h.b16 %v1046
        %v1137 = vunpack.c.l.b16 %v1047
        %v1138 = vunpack.c.h.b16 %v1047
        %v1139 = vunpack.c.l.b16 %v1048
        %v1140 = vunpack.c.h.b16 %v1048
        %v1141 = vunpack.c.l.b16 %v1049
        %v1142 = vunpack.c.h.b16 %v1049
        %v1143 = vunpack.c.l.b16 %v1050
        %v1144 = vunpack.c.h.b16 %v1050
        %v1145 = vunpack.c.l.b16 %v1051
        %v1146 = vunpack.c.h.b16 %v1051
        %v1147 = vunpack.c.l.b16 %v1052
        %v1148 = vunpack.c.h.b16 %v1052
        %v1149 = vunpack.c.l.b16 %v1053
        %v1150 = vunpack.c.h.b16 %v1053
        %v1151 = vunpack.c.l.b16 %v1054
        %v1152 = vunpack.c.h.b16 %v1054
        %v1153 = vunpack.c.l.b16 %v1055
        %v1154 = vunpack.c.h.b16 %v1055
        %v1155 = vunpack.c.l.b16 %v1056
        %v1156 = vunpack.c.h.b16 %v1056
        %v1157 = vpack.c.b16 %v1095, %v1093
        %v1158 = vpack.c.b16 %v1096, %v1094
        %v1159 = vpack.c.b16 %v1099, %v1097
        %v1160 = vpack.c.b16 %v1100, %v1098
        %v1161 = vpack.c.b16 %v1103, %v1101
        %v1162 = vpack.c.b16 %v1104, %v1102
        %v1163 = vpack.c.b16 %v1107, %v1105
        %v1164 = vpack.c.b16 %v1108, %v1106
        %v1165 = vpack.c.b16 %v1111, %v1109
        %v1166 = vpack.c.b16 %v1112, %v1110
        %v1167 = vpack.c.b16 %v1115, %v1113
        %v1168 = vpack.c.b16 %v1116, %v1114
        %v1169 = vpack.c.b16 %v1119, %v1117
        %v1170 = vpack.c.b16 %v1120, %v1118
        %v1171 = vpack.c.b16 %v1123, %v1121
        %v1172 = vpack.c.b16 %v1124, %v1122
        %v1173 = vpack.c.b16 %v1127, %v1125
        %v1174 = vpack.c.b16 %v1128, %v1126
        %v1175 = vpack.c.b16 %v1131, %v1129
        %v1176 = vpack.c.b16 %v1132, %v1130
        %v1177 = vpack.c.b16 %v1135, %v1133
        %v1178 = vpack.c.b16 %v1136, %v1134
        %v1179 = vpack.c.b16 %v1139, %v1137
        %v1180 = vpack.c.b16 %v1140, %v1138
        %v1181 = vpack.c.b16 %v1143, %v1141
        %v1182 = vpack.c.b16 %v1144, %v1142
        %v1183 = vpack.c.b16 %v1147, %v1145
        %v1184 = vpack.c.b16 %v1148, %v1146
        %v1185 = vpack.c.b16 %v1151, %v1149
        %v1186 = vpack.c.b16 %v1152, %v1150
        %v1187 = vpack.c.b16 %v1155, %v1153
        %v1188 = vpack.c.b16 %v1156, %v1154
        %1221 = vmatprep.subr.bf16.mxu0 %v1172
        %1222 = vmatpush1.bf16.msra.mxu0 %v1171
        %1223 = vmatprep.subr.bf16.mxu0 %v1170
        %1224 = vmatpush1.bf16.msra.mxu0 %v1169
        %1225 = vmatprep.subr.bf16.mxu0 %v1168
        %1226 = vmatpush1.bf16.msra.mxu0 %v1167
        %1227 = vmatprep.subr.bf16.mxu0 %v1166
        %1228 = vmatpush1.bf16.msra.mxu0 %v1165
        %1229 = vmatprep.subr.bf16.mxu0 %v1164
        %1230 = vmatpush1.bf16.msra.mxu0 %v1163
        %1231 = vmatprep.subr.bf16.mxu0 %v1162
        %1232 = vmatpush1.bf16.msra.mxu0 %v1161
        %1233 = vmatprep.subr.bf16.mxu0 %v1160
        %1234 = vmatpush1.bf16.msra.mxu0 %v1159
        %1235 = vmatprep.subr.bf16.mxu0 %v1158
        %1236 = vmatpush1.bf16.msra.mxu0 %v1157
        %1237 = vmatprep.subr.bf16.mxu0 %v1188
        %1238 = vmatpush2.bf16.msra.mxu0 %v1187
        %1239 = vmatprep.subr.bf16.mxu0 %v1186
        %1240 = vmatpush2.bf16.msra.mxu0 %v1185
        %1241 = vmatprep.subr.bf16.mxu0 %v1184
        %1242 = vmatpush2.bf16.msra.mxu0 %v1183
        %1243 = vmatprep.subr.bf16.mxu0 %v1182
        %1244 = vmatpush2.bf16.msra.mxu0 %v1181
        %1245 = vmatprep.subr.bf16.mxu0 %v1180
        %1246 = vmatpush2.bf16.msra.mxu0 %v1179
        %1247 = vmatprep.subr.bf16.mxu0 %v1178
        %1248 = vmatpush2.bf16.msra.mxu0 %v1177
        %1249 = vmatprep.subr.bf16.mxu0 %v1176
        %1250 = vmatpush2.bf16.msra.mxu0 %v1175
        %1251 = vmatprep.subr.bf16.mxu0 %v1174
        %1252 = vmatpush2.bf16.msra.mxu0 %v1173
        %1253 = vmatprep.mubr.bf16.mxu0 %v1060
        %1254 = vmatmul.mubr.bf16.gmra.mxu0 %v1059
        %v1255 = vpop.f32.mrf.mxu0
        %v1256 = vadd.f32 0.0, %v1255
        %v1257 = vpop.f32.mrf.mxu0
        %v1258 = vadd.f32 0.0, %v1257
        %v1259 = vpop.f32.mrf.mxu0
        %v1260 = vpop.f32.mrf.mxu0
        %1261 = vdwg.mxu0
        %v1262 = vadd.f32 %v991, %v1256
        %v1263 = vadd.f32 %v993, %v1258
        %v1264 = vtanh.pop %v1262
        %v1265 = vtanh.pop %v1263
        %v1266 = vpack.c.bf16 %v1264, %v1264
        %v1267 = vpack.c.bf16 %v1265, %v1265
        %1268 = vmatprep.subr.bf16.mxu0 %v1172
        %1269 = vmatpush1.bf16.msra.mxu0 %v1171
        %1270 = vmatprep.subr.bf16.mxu0 %v1170
        %1271 = vmatpush1.bf16.msra.mxu0 %v1169
        %1272 = vmatprep.subr.bf16.mxu0 %v1168
        %1273 = vmatpush1.bf16.msra.mxu0 %v1167
        %1274 = vmatprep.subr.bf16.mxu0 %v1166
        %1275 = vmatpush1.bf16.msra.mxu0 %v1165
        %1276 = vmatprep.subr.bf16.mxu0 %v1164
        %1277 = vmatpush1.bf16.msra.mxu0 %v1163
        %1278 = vmatprep.subr.bf16.mxu0 %v1162
        %1279 = vmatpush1.bf16.msra.mxu0 %v1161
        %1280 = vmatprep.subr.bf16.mxu0 %v1160
        %1281 = vmatpush1.bf16.msra.mxu0 %v1159
        %1282 = vmatprep.subr.bf16.mxu0 %v1158
        %1283 = vmatpush1.bf16.msra.mxu0 %v1157
        %1284 = vmatprep.subr.bf16.mxu0 %v1188
        %1285 = vmatpush2.bf16.msra.mxu0 %v1187
        %1286 = vmatprep.subr.bf16.mxu0 %v1186
        %1287 = vmatpush2.bf16.msra.mxu0 %v1185
        %1288 = vmatprep.subr.bf16.mxu0 %v1184
        %1289 = vmatpush2.bf16.msra.mxu0 %v1183
        %1290 = vmatprep.subr.bf16.mxu0 %v1182
        %1291 = vmatpush2.bf16.msra.mxu0 %v1181
        %1292 = vmatprep.subr.bf16.mxu0 %v1180
        %1293 = vmatpush2.bf16.msra.mxu0 %v1179
        %1294 = vmatprep.subr.bf16.mxu0 %v1178
        %1295 = vmatpush2.bf16.msra.mxu0 %v1177
        %1296 = vmatprep.subr.bf16.mxu0 %v1176
        %1297 = vmatpush2.bf16.msra.mxu0 %v1175
        %1298 = vmatprep.subr.bf16.mxu0 %v1174
        %1299 = vmatpush2.bf16.msra.mxu0 %v1173
        %1300 = vmatprep.mubr.bf16.mxu0 %v1267
        %1301 = vmatmul.mubr.bf16.gmra.mxu0 %v1266
        %v1302 = vpop.f32.mrf.mxu0
        %v1303 = vadd.f32 0.0, %v1302
        %v1304 = vpop.f32.mrf.mxu0
        %v1305 = vadd.f32 0.0, %v1304
        %v1306 = vpop.f32.mrf.mxu0
        %v1307 = vpop.f32.mrf.mxu0
        %1308 = vdwg.mxu0
        %v1309 = vadd.f32 %v997, %v1303
        %v1310 = vadd.f32 %v999, %v1305
        %v1311 = vtanh.pop %v1309
        %v1312 = vtanh.pop %v1310
        %v1313 = vpack.c.bf16 %v1311, %v1311
        %v1314 = vpack.c.bf16 %v1312, %v1312
        %1315 = vmatprep.subr.bf16.mxu0 %v1172
        %1316 = vmatpush1.bf16.msra.mxu0 %v1171
        %1317 = vmatprep.subr.bf16.mxu0 %v1170
        %1318 = vmatpush1.bf16.msra.mxu0 %v1169
        %1319 = vmatprep.subr.bf16.mxu0 %v1168
        %1320 = vmatpush1.bf16.msra.mxu0 %v1167
        %1321 = vmatprep.subr.bf16.mxu0 %v1166
        %1322 = vmatpush1.bf16.msra.mxu0 %v1165
        %1323 = vmatprep.subr.bf16.mxu0 %v1164
        %1324 = vmatpush1.bf16.msra.mxu0 %v1163
        %1325 = vmatprep.subr.bf16.mxu0 %v1162
        %1326 = vmatpush1.bf16.msra.mxu0 %v1161
        %1327 = vmatprep.subr.bf16.mxu0 %v1160
        %1328 = vmatpush1.bf16.msra.mxu0 %v1159
        %1329 = vmatprep.subr.bf16.mxu0 %v1158
        %1330 = vmatpush1.bf16.msra.mxu0 %v1157
        %1331 = vmatprep.subr.bf16.mxu0 %v1188
        %1332 = vmatpush2.bf16.msra.mxu0 %v1187
        %1333 = vmatprep.subr.bf16.mxu0 %v1186
        %1334 = vmatpush2.bf16.msra.mxu0 %v1185
        %1335 = vmatprep.subr.bf16.mxu0 %v1184
        %1336 = vmatpush2.bf16.msra.mxu0 %v1183
        %1337 = vmatprep.subr.bf16.mxu0 %v1182
        %1338 = vmatpush2.bf16.msra.mxu0 %v1181
        %1339 = vmatprep.subr.bf16.mxu0 %v1180
        %1340 = vmatpush2.bf16.msra.mxu0 %v1179
        %1341 = vmatprep.subr.bf16.mxu0 %v1178
        %1342 = vmatpush2.bf16.msra.mxu0 %v1177
        %1343 = vmatprep.subr.bf16.mxu0 %v1176
        %1344 = vmatpush2.bf16.msra.mxu0 %v1175
        %1345 = vmatprep.subr.bf16.mxu0 %v1174
        %1346 = vmatpush2.bf16.msra.mxu0 %v1173
        %1347 = vmatprep.mubr.bf16.mxu0 %v1314
        %1348 = vmatmul.mubr.bf16.gmra.mxu0 %v1313
        %v1349 = vpop.f32.mrf.mxu0
        %v1350 = vadd.f32 0.0, %v1349
        %v1351 = vpop.f32.mrf.mxu0
        %v1352 = vadd.f32 0.0, %v1351
        %v1353 = vpop.f32.mrf.mxu0
        %v1354 = vpop.f32.mrf.mxu0
        %1355 = vdwg.mxu0
        %v1356 = vadd.f32 %v1001, %v1350
        %v1357 = vadd.f32 %v1003, %v1352
        %v1358 = vtanh.pop %v1356
        %v1359 = vtanh.pop %v1357
        %v1360 = vpack.c.bf16 %v1358, %v1358
        %v1361 = vpack.c.bf16 %v1359, %v1359
        %1362 = vmatprep.subr.bf16.mxu0 %v1172
        %1363 = vmatpush1.bf16.msra.mxu0 %v1171
        %1364 = vmatprep.subr.bf16.mxu0 %v1170
        %1365 = vmatpush1.bf16.msra.mxu0 %v1169
        %1366 = vmatprep.subr.bf16.mxu0 %v1168
        %1367 = vmatpush1.bf16.msra.mxu0 %v1167
        %1368 = vmatprep.subr.bf16.mxu0 %v1166
        %1369 = vmatpush1.bf16.msra.mxu0 %v1165
        %1370 = vmatprep.subr.bf16.mxu0 %v1164
        %1371 = vmatpush1.bf16.msra.mxu0 %v1163
        %1372 = vmatprep.subr.bf16.mxu0 %v1162
        %1373 = vmatpush1.bf16.msra.mxu0 %v1161
        %1374 = vmatprep.subr.bf16.mxu0 %v1160
        %1375 = vmatpush1.bf16.msra.mxu0 %v1159
        %1376 = vmatprep.subr.bf16.mxu0 %v1158
        %1377 = vmatpush1.bf16.msra.mxu0 %v1157
        %1378 = vmatprep.subr.bf16.mxu0 %v1188
        %1379 = vmatpush2.bf16.msra.mxu0 %v1187
        %1380 = vmatprep.subr.bf16.mxu0 %v1186
        %1381 = vmatpush2.bf16.msra.mxu0 %v1185
        %1382 = vmatprep.subr.bf16.mxu0 %v1184
        %1383 = vmatpush2.bf16.msra.mxu0 %v1183
        %1384 = vmatprep.subr.bf16.mxu0 %v1182
        %1385 = vmatpush2.bf16.msra.mxu0 %v1181
        %1386 = vmatprep.subr.bf16.mxu0 %v1180
        %1387 = vmatpush2.bf16.msra.mxu0 %v1179
        %1388 = vmatprep.subr.bf16.mxu0 %v1178
        %1389 = vmatpush2.bf16.msra.mxu0 %v1177
        %1390 = vmatprep.subr.bf16.mxu0 %v1176
        %1391 = vmatpush2.bf16.msra.mxu0 %v1175
        %1392 = vmatprep.subr.bf16.mxu0 %v1174
        %1393 = vmatpush2.bf16.msra.mxu0 %v1173
        %1394 = vmatprep.mubr.bf16.mxu0 %v1361
        %1395 = vmatmul.mubr.bf16.gmra.mxu0 %v1360
        %v1396 = vpop.f32.mrf.mxu0
        %v1397 = vadd.f32 0.0, %v1396
        %v1398 = vpop.f32.mrf.mxu0
        %v1399 = vadd.f32 0.0, %v1398
        %v1400 = vpop.f32.mrf.mxu0
        %v1401 = vpop.f32.mrf.mxu0
        %1402 = vdwg.mxu0
        %v1403 = vadd.f32 %v1007, %v1397
        %v1404 = vadd.f32 %v1009, %v1399
        %v1405 = vtanh.pop %v1403
        %v1406 = vtanh.pop %v1404
        %v1407 = vpack.c.bf16 %v1405, %v1405
        %v1408 = vpack.c.bf16 %v1406, %v1406
        %1409 = vmatprep.subr.bf16.mxu0 %v1172
        %1410 = vmatpush1.bf16.msra.mxu0 %v1171
        %1411 = vmatprep.subr.bf16.mxu0 %v1170
        %1412 = vmatpush1.bf16.msra.mxu0 %v1169
        %1413 = vmatprep.subr.bf16.mxu0 %v1168
        %1414 = vmatpush1.bf16.msra.mxu0 %v1167
        %1415 = vmatprep.subr.bf16.mxu0 %v1166
        %1416 = vmatpush1.bf16.msra.mxu0 %v1165
        %1417 = vmatprep.subr.bf16.mxu0 %v1164
        %1418 = vmatpush1.bf16.msra.mxu0 %v1163
        %1419 = vmatprep.subr.bf16.mxu0 %v1162
        %1420 = vmatpush1.bf16.msra.mxu0 %v1161
        %1421 = vmatprep.subr.bf16.mxu0 %v1160
        %1422 = vmatpush1.bf16.msra.mxu0 %v1159
        %1423 = vmatprep.subr.bf16.mxu0 %v1158
        %1424 = vmatpush1.bf16.msra.mxu0 %v1157
        %1425 = vmatprep.subr.bf16.mxu0 %v1188
        %1426 = vmatpush2.bf16.msra.mxu0 %v1187
        %1427 = vmatprep.subr.bf16.mxu0 %v1186
        %1428 = vmatpush2.bf16.msra.mxu0 %v1185
        %1429 = vmatprep.subr.bf16.mxu0 %v1184
        %1430 = vmatpush2.bf16.msra.mxu0 %v1183
        %1431 = vmatprep.subr.bf16.mxu0 %v1182
        %1432 = vmatpush2.bf16.msra.mxu0 %v1181
        %1433 = vmatprep.subr.bf16.mxu0 %v1180
        %1434 = vmatpush2.bf16.msra.mxu0 %v1179
        %1435 = vmatprep.subr.bf16.mxu0 %v1178
        %1436 = vmatpush2.bf16.msra.mxu0 %v1177
        %1437 = vmatprep.subr.bf16.mxu0 %v1176
        %1438 = vmatpush2.bf16.msra.mxu0 %v1175
        %1439 = vmatprep.subr.bf16.mxu0 %v1174
        %1440 = vmatpush2.bf16.msra.mxu0 %v1173
        %1441 = vmatprep.mubr.bf16.mxu0 %v1408
        %1442 = vmatmul.mubr.bf16.gmra.mxu0 %v1407
        %v1443 = vpop.f32.mrf.mxu0
        %v1444 = vadd.f32 0.0, %v1443
        %v1445 = vpop.f32.mrf.mxu0
        %v1446 = vadd.f32 0.0, %v1445
        %v1447 = vpop.f32.mrf.mxu0
        %v1448 = vpop.f32.mrf.mxu0
        %1449 = vdwg.mxu0
        %v1450 = vadd.f32 %v1011, %v1444
        %v1451 = vadd.f32 %v1013, %v1446
        %v1452 = vtanh.pop %v1450
        %v1453 = vtanh.pop %v1451
        %v1454 = vpack.c.bf16 %v1452, %v1452
        %v1455 = vpack.c.bf16 %v1453, %v1453
        %1456 = vmatprep.subr.bf16.mxu0 %v1172
        %1457 = vmatpush1.bf16.msra.mxu0 %v1171
        %1458 = vmatprep.subr.bf16.mxu0 %v1170
        %1459 = vmatpush1.bf16.msra.mxu0 %v1169
        %1460 = vmatprep.subr.bf16.mxu0 %v1168
        %1461 = vmatpush1.bf16.msra.mxu0 %v1167
        %1462 = vmatprep.subr.bf16.mxu0 %v1166
        %1463 = vmatpush1.bf16.msra.mxu0 %v1165
        %1464 = vmatprep.subr.bf16.mxu0 %v1164
        %1465 = vmatpush1.bf16.msra.mxu0 %v1163
        %1466 = vmatprep.subr.bf16.mxu0 %v1162
        %1467 = vmatpush1.bf16.msra.mxu0 %v1161
        %1468 = vmatprep.subr.bf16.mxu0 %v1160
        %1469 = vmatpush1.bf16.msra.mxu0 %v1159
        %1470 = vmatprep.subr.bf16.mxu0 %v1158
        %1471 = vmatpush1.bf16.msra.mxu0 %v1157
        %1472 = vmatprep.subr.bf16.mxu0 %v1188
        %1473 = vmatpush2.bf16.msra.mxu0 %v1187
        %1474 = vmatprep.subr.bf16.mxu0 %v1186
        %1475 = vmatpush2.bf16.msra.mxu0 %v1185
        %1476 = vmatprep.subr.bf16.mxu0 %v1184
        %1477 = vmatpush2.bf16.msra.mxu0 %v1183
        %1478 = vmatprep.subr.bf16.mxu0 %v1182
        %1479 = vmatpush2.bf16.msra.mxu0 %v1181
        %1480 = vmatprep.subr.bf16.mxu0 %v1180
        %1481 = vmatpush2.bf16.msra.mxu0 %v1179
        %1482 = vmatprep.subr.bf16.mxu0 %v1178
        %1483 = vmatpush2.bf16.msra.mxu0 %v1177
        %1484 = vmatprep.subr.bf16.mxu0 %v1176
        %1485 = vmatpush2.bf16.msra.mxu0 %v1175
        %1486 = vmatprep.subr.bf16.mxu0 %v1174
        %1487 = vmatpush2.bf16.msra.mxu0 %v1173
        %1488 = vmatprep.mubr.bf16.mxu0 %v1455
        %1489 = vmatmul.mubr.bf16.gmra.mxu0 %v1454
        %v1490 = vpop.f32.mrf.mxu0
        %v1491 = vadd.f32 0.0, %v1490
        %v1492 = vpop.f32.mrf.mxu0
        %v1493 = vadd.f32 0.0, %v1492
        %v1494 = vpop.f32.mrf.mxu0
        %v1495 = vpop.f32.mrf.mxu0
        %1496 = vdwg.mxu0
        %v1497 = vadd.f32 %v1017, %v1491
        %v1498 = vadd.f32 %v1019, %v1493
        %v1499 = vtanh.pop %v1497
        %v1500 = vtanh.pop %v1498
        %v1501 = vpack.c.bf16 %v1499, %v1499
        %v1502 = vpack.c.bf16 %v1500, %v1500
        %1503 = vmatprep.subr.bf16.mxu0 %v1172
        %1504 = vmatpush1.bf16.msra.mxu0 %v1171
        %1505 = vmatprep.subr.bf16.mxu0 %v1170
        %1506 = vmatpush1.bf16.msra.mxu0 %v1169
        %1507 = vmatprep.subr.bf16.mxu0 %v1168
        %1508 = vmatpush1.bf16.msra.mxu0 %v1167
        %1509 = vmatprep.subr.bf16.mxu0 %v1166
        %1510 = vmatpush1.bf16.msra.mxu0 %v1165
        %1511 = vmatprep.subr.bf16.mxu0 %v1164
        %1512 = vmatpush1.bf16.msra.mxu0 %v1163
        %1513 = vmatprep.subr.bf16.mxu0 %v1162
        %1514 = vmatpush1.bf16.msra.mxu0 %v1161
        %1515 = vmatprep.subr.bf16.mxu0 %v1160
        %1516 = vmatpush1.bf16.msra.mxu0 %v1159
        %1517 = vmatprep.subr.bf16.mxu0 %v1158
        %1518 = vmatpush1.bf16.msra.mxu0 %v1157
        %1519 = vmatprep.subr.bf16.mxu0 %v1188
        %1520 = vmatpush2.bf16.msra.mxu0 %v1187
        %1521 = vmatprep.subr.bf16.mxu0 %v1186
        %1522 = vmatpush2.bf16.msra.mxu0 %v1185
        %1523 = vmatprep.subr.bf16.mxu0 %v1184
        %1524 = vmatpush2.bf16.msra.mxu0 %v1183
        %1525 = vmatprep.subr.bf16.mxu0 %v1182
        %1526 = vmatpush2.bf16.msra.mxu0 %v1181
        %1527 = vmatprep.subr.bf16.mxu0 %v1180
        %1528 = vmatpush2.bf16.msra.mxu0 %v1179
        %1529 = vmatprep.subr.bf16.mxu0 %v1178
        %1530 = vmatpush2.bf16.msra.mxu0 %v1177
        %1531 = vmatprep.subr.bf16.mxu0 %v1176
        %1532 = vmatpush2.bf16.msra.mxu0 %v1175
        %1533 = vmatprep.subr.bf16.mxu0 %v1174
        %1534 = vmatpush2.bf16.msra.mxu0 %v1173
        %1535 = vmatprep.mubr.bf16.mxu0 %v1502
        %1536 = vmatmul.mubr.bf16.gmra.mxu0 %v1501
        %v1537 = vpop.f32.mrf.mxu0
        %v1538 = vadd.f32 0.0, %v1537
        %v1539 = vpop.f32.mrf.mxu0
        %v1540 = vadd.f32 0.0, %v1539
        %v1541 = vpop.f32.mrf.mxu0
        %v1542 = vpop.f32.mrf.mxu0
        %1543 = vdwg.mxu0
        %v1544 = vadd.f32 %v1021, %v1538
        %v1545 = vadd.f32 %v1023, %v1540
        %v1546 = vtanh.pop %v1544
        %v1547 = vtanh.pop %v1545
        %v1548 = vld [vmem:[%s585] sm:$0xff]
        %v1549 = vld [vmem:[%s585 + $0x8] sm:$0xff]
        %v1550 = vld [vmem:[%s585 + $0x10] sm:$0xff]
        %v1551 = vld [vmem:[%s585 + $0x18] sm:$0xff]
        %v1552 = vld [vmem:[%s585 + $0x20] sm:$0xff]
        %v1553 = vld [vmem:[%s585 + $0x28] sm:$0xff]
        %v1554 = vld [vmem:[%s585 + $0x30] sm:$0xff]
        %v1555 = vld [vmem:[%s585 + $0x38] sm:$0xff]
        %v1556 = vld [vmem:[%s585 + $0x40] sm:$0xff]
        %v1557 = vld [vmem:[%s585 + $0x48] sm:$0xff]
        %v1558 = vld [vmem:[%s585 + $0x50] sm:$0xff]
        %v1559 = vld [vmem:[%s585 + $0x58] sm:$0xff]
        %v1560 = vld [vmem:[%s585 + $0x60] sm:$0xff]
        %v1561 = vld [vmem:[%s585 + $0x68] sm:$0xff]
        %v1562 = vld [vmem:[%s585 + $0x70] sm:$0xff]
        %v1563 = vld [vmem:[%s585 + $0x78] sm:$0xff]
        %v1564 = vld [vmem:[%s585 + $0x80] sm:$0xff]
        %v1565 = vld [vmem:[%s585 + $0x88] sm:$0xff]
        %v1566 = vld [vmem:[%s585 + $0x90] sm:$0xff]
        %v1567 = vld [vmem:[%s585 + $0x98] sm:$0xff]
        %v1568 = vld [vmem:[%s585 + $0xa0] sm:$0xff]
        %v1569 = vld [vmem:[%s585 + $0xa8] sm:$0xff]
        %v1570 = vld [vmem:[%s585 + $0xb0] sm:$0xff]
        %v1571 = vld [vmem:[%s585 + $0xb8] sm:$0xff]
        %v1572 = vld [vmem:[%s585 + $0xc0] sm:$0xff]
        %v1573 = vld [vmem:[%s585 + $0xc8] sm:$0xff]
        %v1574 = vld [vmem:[%s585 + $0xd0] sm:$0xff]
        %v1575 = vld [vmem:[%s585 + $0xd8] sm:$0xff]
        %v1576 = vld [vmem:[%s585 + $0xe0] sm:$0xff]
        %v1577 = vld [vmem:[%s585 + $0xe8] sm:$0xff]
        %v1578 = vld [vmem:[%s585 + $0xf0] sm:$0xff]
        %v1579 = vld [vmem:[%s585 + $0xf8] sm:$0xff]
        %v1580 = vpack.c.bf16 %v1546, %v1546
        %v1581 = vpack.c.bf16 %v1547, %v1547
        %v1582 = vld [vmem:[%s699] sm:$0x3]
        %v1584 = vlaneseq
        %v1585 = vshrl.u32 %v1584, 7
        %v1586 = vsub.s32 0, %v1585
        %v1587 = vrot.slane %v1582, %v1586
        %v1588 = vlaneseq
        %v1589 = vshrl.u32 %v1588, 7
        %v1590 = vsub.s32 1, %v1589
        %v1591 = vrot.slane %v1582, %v1590
        %v1626 = vunpack.c.l.b16 %v1548
        %v1627 = vunpack.c.h.b16 %v1548
        %v1628 = vunpack.c.l.b16 %v1549
        %v1629 = vunpack.c.h.b16 %v1549
        %v1630 = vunpack.c.l.b16 %v1550
        %v1631 = vunpack.c.h.b16 %v1550
        %v1632 = vunpack.c.l.b16 %v1551
        %v1633 = vunpack.c.h.b16 %v1551
        %v1634 = vunpack.c.l.b16 %v1552
        %v1635 = vunpack.c.h.b16 %v1552
        %v1636 = vunpack.c.l.b16 %v1553
        %v1637 = vunpack.c.h.b16 %v1553
        %v1638 = vunpack.c.l.b16 %v1554
        %v1639 = vunpack.c.h.b16 %v1554
        %v1640 = vunpack.c.l.b16 %v1555
        %v1641 = vunpack.c.h.b16 %v1555
        %v1642 = vunpack.c.l.b16 %v1556
        %v1643 = vunpack.c.h.b16 %v1556
        %v1644 = vunpack.c.l.b16 %v1557
        %v1645 = vunpack.c.h.b16 %v1557
        %v1646 = vunpack.c.l.b16 %v1558
        %v1647 = vunpack.c.h.b16 %v1558
        %v1648 = vunpack.c.l.b16 %v1559
        %v1649 = vunpack.c.h.b16 %v1559
        %v1650 = vunpack.c.l.b16 %v1560
        %v1651 = vunpack.c.h.b16 %v1560
        %v1652 = vunpack.c.l.b16 %v1561
        %v1653 = vunpack.c.h.b16 %v1561
        %v1654 = vunpack.c.l.b16 %v1562
        %v1655 = vunpack.c.h.b16 %v1562
        %v1656 = vunpack.c.l.b16 %v1563
        %v1657 = vunpack.c.h.b16 %v1563
        %v1658 = vunpack.c.l.b16 %v1564
        %v1659 = vunpack.c.h.b16 %v1564
        %v1660 = vunpack.c.l.b16 %v1565
        %v1661 = vunpack.c.h.b16 %v1565
        %v1662 = vunpack.c.l.b16 %v1566
        %v1663 = vunpack.c.h.b16 %v1566
        %v1664 = vunpack.c.l.b16 %v1567
        %v1665 = vunpack.c.h.b16 %v1567
        %v1666 = vunpack.c.l.b16 %v1568
        %v1667 = vunpack.c.h.b16 %v1568
        %v1668 = vunpack.c.l.b16 %v1569
        %v1669 = vunpack.c.h.b16 %v1569
        %v1670 = vunpack.c.l.b16 %v1570
        %v1671 = vunpack.c.h.b16 %v1570
        %v1672 = vunpack.c.l.b16 %v1571
        %v1673 = vunpack.c.h.b16 %v1571
        %v1674 = vunpack.c.l.b16 %v1572
        %v1675 = vunpack.c.h.b16 %v1572
        %v1676 = vunpack.c.l.b16 %v1573
        %v1677 = vunpack.c.h.b16 %v1573
        %v1678 = vunpack.c.l.b16 %v1574
        %v1679 = vunpack.c.h.b16 %v1574
        %v1680 = vunpack.c.l.b16 %v1575
        %v1681 = vunpack.c.h.b16 %v1575
        %v1682 = vunpack.c.l.b16 %v1576
        %v1683 = vunpack.c.h.b16 %v1576
        %v1684 = vunpack.c.l.b16 %v1577
        %v1685 = vunpack.c.h.b16 %v1577
        %v1686 = vunpack.c.l.b16 %v1578
        %v1687 = vunpack.c.h.b16 %v1578
        %v1688 = vunpack.c.l.b16 %v1579
        %v1689 = vunpack.c.h.b16 %v1579
        %v1690 = vpack.c.b16 %v1628, %v1626
        %v1691 = vpack.c.b16 %v1629, %v1627
        %v1692 = vpack.c.b16 %v1632, %v1630
        %v1693 = vpack.c.b16 %v1633, %v1631
        %v1694 = vpack.c.b16 %v1636, %v1634
        %v1695 = vpack.c.b16 %v1637, %v1635
        %v1696 = vpack.c.b16 %v1640, %v1638
        %v1697 = vpack.c.b16 %v1641, %v1639
        %v1698 = vpack.c.b16 %v1644, %v1642
        %v1699 = vpack.c.b16 %v1645, %v1643
        %v1700 = vpack.c.b16 %v1648, %v1646
        %v1701 = vpack.c.b16 %v1649, %v1647
        %v1702 = vpack.c.b16 %v1652, %v1650
        %v1703 = vpack.c.b16 %v1653, %v1651
        %v1704 = vpack.c.b16 %v1656, %v1654
        %v1705 = vpack.c.b16 %v1657, %v1655
        %v1706 = vpack.c.b16 %v1660, %v1658
        %v1707 = vpack.c.b16 %v1661, %v1659
        %v1708 = vpack.c.b16 %v1664, %v1662
        %v1709 = vpack.c.b16 %v1665, %v1663
        %v1710 = vpack.c.b16 %v1668, %v1666
        %v1711 = vpack.c.b16 %v1669, %v1667
        %v1712 = vpack.c.b16 %v1672, %v1670
        %v1713 = vpack.c.b16 %v1673, %v1671
        %v1714 = vpack.c.b16 %v1676, %v1674
        %v1715 = vpack.c.b16 %v1677, %v1675
        %v1716 = vpack.c.b16 %v1680, %v1678
        %v1717 = vpack.c.b16 %v1681, %v1679
        %v1718 = vpack.c.b16 %v1684, %v1682
        %v1719 = vpack.c.b16 %v1685, %v1683
        %v1720 = vpack.c.b16 %v1688, %v1686
        %v1721 = vpack.c.b16 %v1689, %v1687
        %1754 = vmatprep.subr.bf16.mxu0 %v1705
        %1755 = vmatpush1.bf16.msra.mxu0 %v1704
        %1756 = vmatprep.subr.bf16.mxu0 %v1703
        %1757 = vmatpush1.bf16.msra.mxu0 %v1702
        %1758 = vmatprep.subr.bf16.mxu0 %v1701
        %1759 = vmatpush1.bf16.msra.mxu0 %v1700
        %1760 = vmatprep.subr.bf16.mxu0 %v1699
        %1761 = vmatpush1.bf16.msra.mxu0 %v1698
        %1762 = vmatprep.subr.bf16.mxu0 %v1697
        %1763 = vmatpush1.bf16.msra.mxu0 %v1696
        %1764 = vmatprep.subr.bf16.mxu0 %v1695
        %1765 = vmatpush1.bf16.msra.mxu0 %v1694
        %1766 = vmatprep.subr.bf16.mxu0 %v1693
        %1767 = vmatpush1.bf16.msra.mxu0 %v1692
        %1768 = vmatprep.subr.bf16.mxu0 %v1691
        %1769 = vmatpush1.bf16.msra.mxu0 %v1690
        %1770 = vmatprep.subr.bf16.mxu0 %v1721
        %1771 = vmatpush2.bf16.msra.mxu0 %v1720
        %1772 = vmatprep.subr.bf16.mxu0 %v1719
        %1773 = vmatpush2.bf16.msra.mxu0 %v1718
        %1774 = vmatprep.subr.bf16.mxu0 %v1717
        %1775 = vmatpush2.bf16.msra.mxu0 %v1716
        %1776 = vmatprep.subr.bf16.mxu0 %v1715
        %1777 = vmatpush2.bf16.msra.mxu0 %v1714
        %1778 = vmatprep.subr.bf16.mxu0 %v1713
        %1779 = vmatpush2.bf16.msra.mxu0 %v1712
        %1780 = vmatprep.subr.bf16.mxu0 %v1711
        %1781 = vmatpush2.bf16.msra.mxu0 %v1710
        %1782 = vmatprep.subr.bf16.mxu0 %v1709
        %1783 = vmatpush2.bf16.msra.mxu0 %v1708
        %1784 = vmatprep.subr.bf16.mxu0 %v1707
        %1785 = vmatpush2.bf16.msra.mxu0 %v1706
        %1786 = vmatprep.mubr.bf16.mxu0 %v1581
        %1787 = vmatmul.mubr.bf16.gmra.mxu0 %v1580
        %v1788 = vpop.f32.mrf.mxu0
        %v1789 = vadd.f32 %v1587, %v1788
        %v1790 = vpop.f32.mrf.mxu0
        %v1791 = vadd.f32 %v1591, %v1790
        %v1792 = vpop.f32.mrf.mxu0
        %v1793 = vpop.f32.mrf.mxu0
        %1794 = vdwg.mxu0
        %v1795 = vadd.f32 %v1789, %v1791
        %1796 = vadd.xlane.f32.xlu0 %v1795
        %v1797 = vpop.xlane.xlu0 %1796
        %v1798 = vrcp.pop 256.0
        %v1799 = vmul.f32 %v1797, %v1798
        %v1800 = vsub.f32 %v1789, %v1799
        %v1801 = vsub.f32 %v1791, %v1799
        %v1802 = vmul.f32 %v1800, %v1800
        %v1803 = vmul.f32 %v1801, %v1801
        %v1804 = vadd.f32 %v1802, %v1803
        %1805 = vadd.xlane.f32.xlu0 %v1804
        %v1806 = vpop.xlane.xlu0 %1805
        %v1807 = vmul.f32 %v1806, %v1798
        %v1808 = vadd.f32 %v1807, 1e-05
        %v1809 = vrsqrt.pop %v1808
        %v1810 = vmul.f32 %v1800, %v1809
        %v1811 = vmul.f32 %v1801, %v1809
        %v1812 = vld [vmem:[%s703] sm:$0x3]
        %v1814 = vlaneseq
        %v1815 = vshrl.u32 %v1814, 7
        %v1816 = vsub.s32 0, %v1815
        %v1817 = vrot.slane %v1812, %v1816
        %v1818 = vlaneseq
        %v1819 = vshrl.u32 %v1818, 7
        %v1820 = vsub.s32 1, %v1819
        %v1821 = vrot.slane %v1812, %v1820
        %v1824 = vmul.f32 %v1810, %v1817
        %v1825 = vmul.f32 %v1811, %v1821
        %v1826 = vld [vmem:[%s594] sm:$0x3]
        %v1828 = vlaneseq
        %v1829 = vshrl.u32 %v1828, 7
        %v1830 = vsub.s32 0, %v1829
        %v1831 = vrot.slane %v1826, %v1830
        %v1832 = vlaneseq
        %v1833 = vshrl.u32 %v1832, 7
        %v1834 = vsub.s32 1, %v1833
        %v1835 = vrot.slane %v1826, %v1834
        %v1838 = vadd.f32 %v1824, %v1831
        %v1839 = vadd.f32 %v1825, %v1835
        %v1840 = vld [vmem:[%s603] sm:$0xf]
        %v1841 = vld [vmem:[%s603 + $0x4] sm:$0xf]
        %v1842 = vld [vmem:[%s603 + $0x8] sm:$0xf]
        %v1843 = vld [vmem:[%s603 + $0xc] sm:$0xf]
        %v1844 = vld [vmem:[%s603 + $0x10] sm:$0xf]
        %v1845 = vld [vmem:[%s603 + $0x14] sm:$0xf]
        %v1846 = vld [vmem:[%s603 + $0x18] sm:$0xf]
        %v1847 = vld [vmem:[%s603 + $0x1c] sm:$0xf]
        %v1848 = vld [vmem:[%s603 + $0x20] sm:$0xf]
        %v1849 = vld [vmem:[%s603 + $0x24] sm:$0xf]
        %v1850 = vld [vmem:[%s603 + $0x28] sm:$0xf]
        %v1851 = vld [vmem:[%s603 + $0x2c] sm:$0xf]
        %v1852 = vld [vmem:[%s603 + $0x30] sm:$0xf]
        %v1853 = vld [vmem:[%s603 + $0x34] sm:$0xf]
        %v1854 = vld [vmem:[%s603 + $0x38] sm:$0xf]
        %v1855 = vld [vmem:[%s603 + $0x3c] sm:$0xf]
        %v1856 = vld [vmem:[%s603 + $0x40] sm:$0xf]
        %v1857 = vld [vmem:[%s603 + $0x44] sm:$0xf]
        %v1858 = vld [vmem:[%s603 + $0x48] sm:$0xf]
        %v1859 = vld [vmem:[%s603 + $0x4c] sm:$0xf]
        %v1860 = vld [vmem:[%s603 + $0x50] sm:$0xf]
        %v1861 = vld [vmem:[%s603 + $0x54] sm:$0xf]
        %v1862 = vld [vmem:[%s603 + $0x58] sm:$0xf]
        %v1863 = vld [vmem:[%s603 + $0x5c] sm:$0xf]
        %v1864 = vld [vmem:[%s603 + $0x60] sm:$0xf]
        %v1865 = vld [vmem:[%s603 + $0x64] sm:$0xf]
        %v1866 = vld [vmem:[%s603 + $0x68] sm:$0xf]
        %v1867 = vld [vmem:[%s603 + $0x6c] sm:$0xf]
        %v1868 = vld [vmem:[%s603 + $0x70] sm:$0xf]
        %v1869 = vld [vmem:[%s603 + $0x74] sm:$0xf]
        %v1870 = vld [vmem:[%s603 + $0x78] sm:$0xf]
        %v1871 = vld [vmem:[%s603 + $0x7c] sm:$0xf]
        %v1872 = vpack.c.bf16 %v1838, %v1838
        %v1873 = vpack.c.bf16 %v1839, %v1839
        %v1874 = vld [vmem:[%s706] sm:$0x1]
        %v1876 = vlaneseq
        %v1877 = vshrl.u32 %v1876, 7
        %v1878 = vsub.s32 0, %v1877
        %v1879 = vrot.slane %v1874, %v1878
        %v1913 = vunpack.c.l.b16 %v1840
        %v1914 = vunpack.c.l.b16 %v1841
        %v1915 = vunpack.c.l.b16 %v1842
        %v1916 = vunpack.c.l.b16 %v1843
        %v1917 = vunpack.c.l.b16 %v1844
        %v1918 = vunpack.c.l.b16 %v1845
        %v1919 = vunpack.c.l.b16 %v1846
        %v1920 = vunpack.c.l.b16 %v1847
        %v1921 = vunpack.c.l.b16 %v1848
        %v1922 = vunpack.c.l.b16 %v1849
        %v1923 = vunpack.c.l.b16 %v1850
        %v1924 = vunpack.c.l.b16 %v1851
        %v1925 = vunpack.c.l.b16 %v1852
        %v1926 = vunpack.c.l.b16 %v1853
        %v1927 = vunpack.c.l.b16 %v1854
        %v1928 = vunpack.c.l.b16 %v1855
        %v1929 = vunpack.c.l.b16 %v1856
        %v1930 = vunpack.c.l.b16 %v1857
        %v1931 = vunpack.c.l.b16 %v1858
        %v1932 = vunpack.c.l.b16 %v1859
        %v1933 = vunpack.c.l.b16 %v1860
        %v1934 = vunpack.c.l.b16 %v1861
        %v1935 = vunpack.c.l.b16 %v1862
        %v1936 = vunpack.c.l.b16 %v1863
        %v1937 = vunpack.c.l.b16 %v1864
        %v1938 = vunpack.c.l.b16 %v1865
        %v1939 = vunpack.c.l.b16 %v1866
        %v1940 = vunpack.c.l.b16 %v1867
        %v1941 = vunpack.c.l.b16 %v1868
        %v1942 = vunpack.c.l.b16 %v1869
        %v1943 = vunpack.c.l.b16 %v1870
        %v1944 = vunpack.c.l.b16 %v1871
        %v1945 = vpack.c.b16 %v1914, %v1913
        %v1946 = vpack.c.b16 %v1916, %v1915
        %v1947 = vpack.c.b16 %v1918, %v1917
        %v1948 = vpack.c.b16 %v1920, %v1919
        %v1949 = vpack.c.b16 %v1922, %v1921
        %v1950 = vpack.c.b16 %v1924, %v1923
        %v1951 = vpack.c.b16 %v1926, %v1925
        %v1952 = vpack.c.b16 %v1928, %v1927
        %v1953 = vpack.c.b16 %v1930, %v1929
        %v1954 = vpack.c.b16 %v1932, %v1931
        %v1955 = vpack.c.b16 %v1934, %v1933
        %v1956 = vpack.c.b16 %v1936, %v1935
        %v1957 = vpack.c.b16 %v1938, %v1937
        %v1958 = vpack.c.b16 %v1940, %v1939
        %v1959 = vpack.c.b16 %v1942, %v1941
        %v1960 = vpack.c.b16 %v1944, %v1943
        %1977 = vmatprep.subr.bf16.mxu0 0
        %1978 = vmatpush1.bf16.msra.mxu0 %v1952
        %1979 = vmatprep.subr.bf16.mxu0 0
        %1980 = vmatpush1.bf16.msra.mxu0 %v1951
        %1981 = vmatprep.subr.bf16.mxu0 0
        %1982 = vmatpush1.bf16.msra.mxu0 %v1950
        %1983 = vmatprep.subr.bf16.mxu0 0
        %1984 = vmatpush1.bf16.msra.mxu0 %v1949
        %1985 = vmatprep.subr.bf16.mxu0 0
        %1986 = vmatpush1.bf16.msra.mxu0 %v1948
        %1987 = vmatprep.subr.bf16.mxu0 0
        %1988 = vmatpush1.bf16.msra.mxu0 %v1947
        %1989 = vmatprep.subr.bf16.mxu0 0
        %1990 = vmatpush1.bf16.msra.mxu0 %v1946
        %1991 = vmatprep.subr.bf16.mxu0 0
        %1992 = vmatpush1.bf16.msra.mxu0 %v1945
        %1993 = vmatprep.subr.bf16.mxu0 0
        %1994 = vmatpush2.bf16.msra.mxu0 %v1960
        %1995 = vmatprep.subr.bf16.mxu0 0
        %1996 = vmatpush2.bf16.msra.mxu0 %v1959
        %1997 = vmatprep.subr.bf16.mxu0 0
        %1998 = vmatpush2.bf16.msra.mxu0 %v1958
        %1999 = vmatprep.subr.bf16.mxu0 0
        %2000 = vmatpush2.bf16.msra.mxu0 %v1957
        %2001 = vmatprep.subr.bf16.mxu0 0
        %2002 = vmatpush2.bf16.msra.mxu0 %v1956
        %2003 = vmatprep.subr.bf16.mxu0 0
        %2004 = vmatpush2.bf16.msra.mxu0 %v1955
        %2005 = vmatprep.subr.bf16.mxu0 0
        %2006 = vmatpush2.bf16.msra.mxu0 %v1954
        %2007 = vmatprep.subr.bf16.mxu0 0
        %2008 = vmatpush2.bf16.msra.mxu0 %v1953
        %2009 = vmatprep.mubr.bf16.mxu0 %v1873
        %2010 = vmatmul.mubr.bf16.gmra.mxu0 %v1872
        %v2011 = vpop.f32.mrf.mxu0
        %v2012 = vadd.f32 %v1879, %v2011
        %v2013 = vpop.f32.mrf.mxu0
        %v2014 = vpop.f32.mrf.mxu0
        %v2015 = vpop.f32.mrf.mxu0
        %2016 = vdwg.mxu0
        %v2017 = vmul.f32 %v2012, 0.5
        %v2018 = vmul.f32 %v2012, 0.044715
        %v2019 = vmul.f32 %v2018, %v2012
        %v2020 = vmul.f32 %v2019, %v2012
        %v2021 = vadd.f32 %v2012, %v2020
        %v2022 = vmul.f32 %v2021, 0.7978846
        %v2023 = vtanh.pop %v2022
        %v2024 = vadd.f32 %v2023, 1.0
        %v2025 = vmul.f32 %v2017, %v2024
        %v2026 = vld [vmem:[%s612] sm:$0xff]
        %v2027 = vld [vmem:[%s612 + $0x8] sm:$0xff]
        %v2028 = vld [vmem:[%s612 + $0x10] sm:$0xff]
        %v2029 = vld [vmem:[%s612 + $0x18] sm:$0xff]
        %v2030 = vld [vmem:[%s612 + $0x20] sm:$0xff]
        %v2031 = vld [vmem:[%s612 + $0x28] sm:$0xff]
        %v2032 = vld [vmem:[%s612 + $0x30] sm:$0xff]
        %v2033 = vld [vmem:[%s612 + $0x38] sm:$0xff]
        %v2034 = vld [vmem:[%s612 + $0x40] sm:$0xff]
        %v2035 = vld [vmem:[%s612 + $0x48] sm:$0xff]
        %v2036 = vld [vmem:[%s612 + $0x50] sm:$0xff]
        %v2037 = vld [vmem:[%s612 + $0x58] sm:$0xff]
        %v2038 = vld [vmem:[%s612 + $0x60] sm:$0xff]
        %v2039 = vld [vmem:[%s612 + $0x68] sm:$0xff]
        %v2040 = vld [vmem:[%s612 + $0x70] sm:$0xff]
        %v2041 = vld [vmem:[%s612 + $0x78] sm:$0xff]
        %v2042 = vpack.c.bf16 %v2025, %v2025
        %v2043 = vld [vmem:[%s710] sm:$0x3]
        %v2045 = vlaneseq
        %v2046 = vshrl.u32 %v2045, 7
        %v2047 = vsub.s32 0, %v2046
        %v2048 = vrot.slane %v2043, %v2047
        %v2049 = vlaneseq
        %v2050 = vshrl.u32 %v2049, 7
        %v2051 = vsub.s32 1, %v2050
        %v2052 = vrot.slane %v2043, %v2051
        %v2071 = vunpack.c.l.b16 %v2026
        %v2072 = vunpack.c.h.b16 %v2026
        %v2073 = vunpack.c.l.b16 %v2027
        %v2074 = vunpack.c.h.b16 %v2027
        %v2075 = vunpack.c.l.b16 %v2028
        %v2076 = vunpack.c.h.b16 %v2028
        %v2077 = vunpack.c.l.b16 %v2029
        %v2078 = vunpack.c.h.b16 %v2029
        %v2079 = vunpack.c.l.b16 %v2030
        %v2080 = vunpack.c.h.b16 %v2030
        %v2081 = vunpack.c.l.b16 %v2031
        %v2082 = vunpack.c.h.b16 %v2031
        %v2083 = vunpack.c.l.b16 %v2032
        %v2084 = vunpack.c.h.b16 %v2032
        %v2085 = vunpack.c.l.b16 %v2033
        %v2086 = vunpack.c.h.b16 %v2033
        %v2087 = vunpack.c.l.b16 %v2034
        %v2088 = vunpack.c.h.b16 %v2034
        %v2089 = vunpack.c.l.b16 %v2035
        %v2090 = vunpack.c.h.b16 %v2035
        %v2091 = vunpack.c.l.b16 %v2036
        %v2092 = vunpack.c.h.b16 %v2036
        %v2093 = vunpack.c.l.b16 %v2037
        %v2094 = vunpack.c.h.b16 %v2037
        %v2095 = vunpack.c.l.b16 %v2038
        %v2096 = vunpack.c.h.b16 %v2038
        %v2097 = vunpack.c.l.b16 %v2039
        %v2098 = vunpack.c.h.b16 %v2039
        %v2099 = vunpack.c.l.b16 %v2040
        %v2100 = vunpack.c.h.b16 %v2040
        %v2101 = vunpack.c.l.b16 %v2041
        %v2102 = vunpack.c.h.b16 %v2041
        %v2103 = vpack.c.b16 %v2073, %v2071
        %v2104 = vpack.c.b16 %v2074, %v2072
        %v2105 = vpack.c.b16 %v2077, %v2075
        %v2106 = vpack.c.b16 %v2078, %v2076
        %v2107 = vpack.c.b16 %v2081, %v2079
        %v2108 = vpack.c.b16 %v2082, %v2080
        %v2109 = vpack.c.b16 %v2085, %v2083
        %v2110 = vpack.c.b16 %v2086, %v2084
        %v2111 = vpack.c.b16 %v2089, %v2087
        %v2112 = vpack.c.b16 %v2090, %v2088
        %v2113 = vpack.c.b16 %v2093, %v2091
        %v2114 = vpack.c.b16 %v2094, %v2092
        %v2115 = vpack.c.b16 %v2097, %v2095
        %v2116 = vpack.c.b16 %v2098, %v2096
        %v2117 = vpack.c.b16 %v2101, %v2099
        %v2118 = vpack.c.b16 %v2102, %v2100
        %2135 = vmatprep.subr.bf16.mxu0 %v2118
        %2136 = vmatpush1.bf16.msra.mxu0 %v2117
        %2137 = vmatprep.subr.bf16.mxu0 %v2116
        %2138 = vmatpush1.bf16.msra.mxu0 %v2115
        %2139 = vmatprep.subr.bf16.mxu0 %v2114
        %2140 = vmatpush1.bf16.msra.mxu0 %v2113
        %2141 = vmatprep.subr.bf16.mxu0 %v2112
        %2142 = vmatpush1.bf16.msra.mxu0 %v2111
        %2143 = vmatprep.subr.bf16.mxu0 %v2110
        %2144 = vmatpush1.bf16.msra.mxu0 %v2109
        %2145 = vmatprep.subr.bf16.mxu0 %v2108
        %2146 = vmatpush1.bf16.msra.mxu0 %v2107
        %2147 = vmatprep.subr.bf16.mxu0 %v2106
        %2148 = vmatpush1.bf16.msra.mxu0 %v2105
        %2149 = vmatprep.subr.bf16.mxu0 %v2104
        %2150 = vmatpush1.bf16.msra.mxu0 %v2103
        %2151 = vmatprep.subr.bf16.mxu0 0
        %2152 = vmatpush2.bf16.msra.mxu0 0
        %2153 = vmatprep.subr.bf16.mxu0 0
        %2154 = vmatpush2.bf16.msra.mxu0 0
        %2155 = vmatprep.subr.bf16.mxu0 0
        %2156 = vmatpush2.bf16.msra.mxu0 0
        %2157 = vmatprep.subr.bf16.mxu0 0
        %2158 = vmatpush2.bf16.msra.mxu0 0
        %2159 = vmatprep.subr.bf16.mxu0 0
        %2160 = vmatpush2.bf16.msra.mxu0 0
        %2161 = vmatprep.subr.bf16.mxu0 0
        %2162 = vmatpush2.bf16.msra.mxu0 0
        %2163 = vmatprep.subr.bf16.mxu0 0
        %2164 = vmatpush2.bf16.msra.mxu0 0
        %2165 = vmatprep.subr.bf16.mxu0 0
        %2166 = vmatpush2.bf16.msra.mxu0 0
        %2167 = vmatprep.mubr.bf16.mxu0 0
        %2168 = vmatmul.mubr.bf16.gmra.mxu0 %v2042
        %v2169 = vpop.f32.mrf.mxu0
        %v2170 = vadd.f32 %v2048, %v2169
        %v2171 = vpop.f32.mrf.mxu0
        %v2172 = vadd.f32 %v2052, %v2171
        %v2173 = vpop.f32.mrf.mxu0
        %v2174 = vpop.f32.mrf.mxu0
        %2175 = vdwg.mxu0
        %v2176 = vadd.f32 %v2170, %v1789
        %v2177 = vadd.f32 %v2172, %v1791
        %p2178 = scmp.eq.s32.totalorder %s42, 0
        // Predicated region
        $region93: #{tpu_custom_call.1} parent=63 // pred_check
          %p2179 = pneg %p2178
        $region94: #{tpu_custom_call.1} parent=63 // pred_check_branch
          %2181 = sbr.rel (%p2179) target = $region96
        $region95: #{tpu_custom_call.1} parent=63 // pred_region
          %2182 = vst [vmem:[%s695] sm:$0xff] 0.0
          %2183 = vst [vmem:[%s695 + $0x8] sm:$0xff] 0.0
        $region96: #{tpu_custom_call.1} parent=63 // pred_fallthru
          _
        %v2184 = vld [vmem:[%s695] sm:$0xff]
        %v2185 = vld [vmem:[%s695 + $0x8] sm:$0xff]
        %v2186 = vadd.f32 %v2184, %v2176
        %v2187 = vadd.f32 %v2185, %v2177
        %2188 = vst [vmem:[%s695] sm:$0xff] %v2186
        %2189 = vst [vmem:[%s695 + $0x8] sm:$0xff] %v2187
        %p2190 = scmp.eq.s32.totalorder %s42, 1
        // Predicated region
        $region97: #{tpu_custom_call.1} parent=63 // pred_check
          %p2191 = pneg %p2190
        $region98: #{tpu_custom_call.1} parent=63 // pred_check_branch
          %2193 = sbr.rel (%p2191) target = $region100
        $region99: #{tpu_custom_call.1} parent=63 // pred_region
          %v2194 = vld [vmem:[%s695] sm:$0xff]
          %v2195 = vld [vmem:[%s695 + $0x8] sm:$0xff]
          %v2196 = vmul.f32 %v2194, 0.5
          %v2197 = vmul.f32 %v2195, 0.5
          %2198 = vst [vmem:[%s695] sm:$0xff] %v2196
          %2199 = vst [vmem:[%s695 + $0x8] sm:$0xff] %v2197
        $region100: #{tpu_custom_call.1} parent=63 // pred_fallthru
          _
        %s2200 = sand.u32 %s343, 1
        %s2201 = scalar_lea.sflag [#allocation4], %s2200
        %s2202 = sand.u32 %s343, 1
        %s2203 = smul.addr %s2202, 16
        %s2204 = scalar_lea.vmem [#allocation14], %s2203
        // Predicated region
        $region101: #{tpu_custom_call.1} parent=63 // pred_check
          %p2205 = pneg %p353
        $region102: #{tpu_custom_call.1} parent=63 // pred_check_branch
          %2207 = sbr.rel (%p2205) target = $region104
        $region103: #{tpu_custom_call.1} parent=63 // pred_region
          %s2209 = ssub.s32 256, 256
          %2210 = vsyncadd %s2201, %s2209
          %s2211 = smul.addr %s41, 2
          %s2212 = smul.addr %s2211, 128
          %s2213 = scalar_lea.hbm %s11, %s2212
          %s2215 = sshll.u32 %s2204, 4
          %s2216 = int_to_ptr.vmem [resolvable:$true] %s2215
          %2218 = dma.vmem_to_hbm [thread:$0]  %s2216, 256, %s2213, %s2201
        $region104: #{tpu_custom_call.1} parent=63 // pred_fallthru
          _
      $region64: #{tpu_custom_call.1} parent=5 // pred_fallthru
        _
      %p2219 = scmp.le.s32.totalorder 2, %s32
      // Predicated region
      $region105: #{tpu_custom_call.1} parent=5 // pred_check
        %p2220 = pneg %p2219
      $region106: #{tpu_custom_call.1} parent=5 // pred_check_branch
        %2222 = sbr.rel (%p2220) target = $region108
      $region107: #{tpu_custom_call.1} parent=5 // pred_region
        %s2223 = ssub.s32 %s32, 2
        // Predicated region
        $region109: #{tpu_custom_call.1} parent=107 // pred_check
          %p2224 = pneg %p359
        $region110: #{tpu_custom_call.1} parent=107 // pred_check_branch
          %2226 = sbr.rel (%p2224) target = $region112
        $region111: #{tpu_custom_call.1} parent=107 // pred_region
          %s2227 = sand.u32 %s344, 1
          %s2228 = scalar_lea.sflag [#allocation4], %s2227
          %s2229 = sand.u32 %s344, 1
          %s2230 = smul.addr %s2229, 16
          %s2231 = scalar_lea.vmem [#allocation14], %s2230
          %2232 = dma.done %s2228, 256
        $region112: #{tpu_custom_call.1} parent=107 // pred_fallthru
          _
      $region108: #{tpu_custom_call.1} parent=5 // pred_fallthru
        _
    $region6: #{tpu_custom_call.1} parent=1 // loop_footer
      %s36 = sadd.s32 1, %s32
    $region7: #{tpu_custom_call.1} parent=1 // loop_footer_branch
      %31 = sbr.rel target = $region3
    $region8: #{tpu_custom_call.1} parent=1 // loop_exit
      _
    %2233 = vsyncpa [#allocation3], 1
    %s2234 = scalar_lea.sflag [#allocation3], 1
    %2235 = vsyncpa %s2234, 1
    %2236 = vsyncpa [#allocation6], 1
    %s2237 = scalar_lea.sflag [#allocation6], 1
    %2238 = vsyncpa %s2237, 1
    %2239 = vsyncpa [#allocation9], 1
    %s2240 = scalar_lea.sflag [#allocation9], 1
    %2241 = vsyncpa %s2240, 1
    %2242 = vsyncpa [#allocation12], 1
    %s2243 = scalar_lea.sflag [#allocation12], 1
    %2244 = vsyncpa %s2243, 1
    %2245 = vsyncpa [#allocation4], 1
    %s2246 = scalar_lea.sflag [#allocation4], 1
    %2247 = vsyncpa %s2246, 1

</llo_original>
